<compile_context>
chip_gen: v7x
topology: tpu7x:2x2x1
jax: 0.10.0
libtpu: 0.0.40
codegen_flags: <defaults>
</compile_context>

<pallas_src>
import jax
import jax.numpy as jnp
from jax import lax
from jax.experimental import pallas as pl
from jax.experimental.pallas import tpu as pltpu

_VMEM_LIMIT = 48 * 1024 * 1024  # fits the tile budget on v5e/v6e/v7x (<=64 MiB phys)


def _round_up(x, m):
    return -(-x // m) * m


def _choose_tm(m):
    """M tile: 512 for large-M layers, single (8/16-aligned) block otherwise."""
    return 512 if m >= 512 else _round_up(m, 16)


def _choose_tk(k):
    if k <= 2048:
        return k
    for cand in (2048, 1024, 512, 256, 128):
        if k % cand == 0:
            return cand
    return k


# ---------------------------------------------------------------------------
# Pallas kernels
# ---------------------------------------------------------------------------
def _make_conv_kernel(act, with_stats):
    """o = act(a @ w + b); optional per-M-tile (sum, sum^2) BN-stat partials."""

    def kernel(a_ref, w_ref, b_ref, *rest):
        if with_stats:
            o_ref, stats_ref, acc_ref = rest
        else:
            o_ref, acc_ref = rest
            stats_ref = None

        k = pl.program_id(1)

        @pl.when(k == 0)
        def _():
            acc_ref[...] = jnp.zeros_like(acc_ref)

        acc_ref[...] += jnp.dot(a_ref[...], w_ref[...],
                                preferred_element_type=jnp.float32)

        @pl.when(k == pl.num_programs(1) - 1)
        def _():
            z = acc_ref[...] + b_ref[...]                       # [tm, Cout] f32
            if with_stats:
                s = jnp.sum(z, axis=0, keepdims=True)           # [1, Cout]
                sq = jnp.sum(z * z, axis=0, keepdims=True)      # [1, Cout]
                rows = lax.broadcasted_iota(jnp.int32, (8, z.shape[1]), 0)
                stats_ref[...] = jnp.where(
                    rows == 0, s, jnp.where(rows == 1, sq, 0.0))[None]
            if act == "leaky":
                z = jnp.where(z >= 0, z, 0.2 * z)
            elif act == "sigmoid":
                z = jax.nn.sigmoid(z)
            o_ref[...] = z.astype(o_ref.dtype)

    return kernel


def conv_matmul(patches, w2, bias, tm, tk, *, act, with_stats, out_dtype):
    """patches [Mp,K] bf16 @ w2 [K,Cout] bf16 + bias, fused epilogue on the MXU."""
    Mp, K = patches.shape
    Cout = w2.shape[1]
    n_m, n_k = Mp // tm, K // tk
    b2 = bias.reshape(1, Cout).astype(jnp.float32)

    if with_stats:
        out_shape = (jax.ShapeDtypeStruct((Mp, Cout), out_dtype),
                     jax.ShapeDtypeStruct((n_m, 8, Cout), jnp.float32))
        out_specs = [pl.BlockSpec((tm, Cout), lambda i, k: (i, 0)),
                     pl.BlockSpec((1, 8, Cout), lambda i, k: (i, 0, 0))]
    else:
        out_shape = jax.ShapeDtypeStruct((Mp, Cout), out_dtype)
        out_specs = pl.BlockSpec((tm, Cout), lambda i, k: (i, 0))

    result = pl.pallas_call(
        _make_conv_kernel(act, with_stats),
        out_shape=out_shape,
        grid_spec=pltpu.PrefetchScalarGridSpec(
            num_scalar_prefetch=0,
            grid=(n_m, n_k),
            in_specs=[
                pl.BlockSpec((tm, tk), lambda i, k: (i, k)),
                pl.BlockSpec((tk, Cout), lambda i, k: (k, 0)),
                pl.BlockSpec((1, Cout), lambda i, k: (0, 0)),
            ],
            out_specs=out_specs,
            scratch_shapes=[pltpu.VMEM((tm, Cout), jnp.float32)],
        ),
        compiler_params=pltpu.CompilerParams(
            dimension_semantics=("parallel", "arbitrary"),
            vmem_limit_bytes=_VMEM_LIMIT),
    )(patches, w2, b2)

    if with_stats:
        conv_out, stats = result
        return conv_out, stats
    return result, None


def _affine_leaky_kernel(x_ref, s_ref, t_ref, o_ref):
    """o = LeakyReLU_0.2(x * scale + shift); math kept in f32, cast on store."""
    z = x_ref[...] * s_ref[...] + t_ref[...]
    o_ref[...] = jnp.where(z >= 0, z, 0.2 * z).astype(o_ref.dtype)


def affine_leaky(x, scale, shift, tm, out_dtype):
    Mp, C = x.shape
    return pl.pallas_call(
        _affine_leaky_kernel,
        out_shape=jax.ShapeDtypeStruct((Mp, C), out_dtype),
        grid=(Mp // tm,),
        in_specs=[
            pl.BlockSpec((tm, C), lambda i: (i, 0)),
            pl.BlockSpec((1, C), lambda i: (0, 0)),
            pl.BlockSpec((1, C), lambda i: (0, 0)),
        ],
        out_specs=pl.BlockSpec((tm, C), lambda i: (i, 0)),
        compiler_params=pltpu.CompilerParams(
            dimension_semantics=("parallel",),
            vmem_limit_bytes=_VMEM_LIMIT),
    )(x, scale.reshape(1, C).astype(jnp.float32),
      shift.reshape(1, C).astype(jnp.float32))


# ---------------------------------------------------------------------------
# JAX glue: im2col, per-layer block, parameter init, forward
# ---------------------------------------------------------------------------
def im2col(x, stride):
    """x: [N, H, W, C] -> patches [N*Ho*Wo, 16*C] for a 4x4 conv with padding=1."""
    N, H, W, C = x.shape
    xp = jnp.pad(x, ((0, 0), (1, 1), (1, 1), (0, 0)))
    Ho = (H + 2 - 4) // stride + 1
    Wo = (W + 2 - 4) // stride + 1
    cols = []
    for kh in range(4):
        for kw in range(4):
            sl = xp[:, kh:kh + (Ho - 1) * stride + 1:stride,
                       kw:kw + (Wo - 1) * stride + 1:stride, :]
            cols.append(sl)                              # [N, Ho, Wo, C]
    patches = jnp.stack(cols, axis=3)                    # [N, Ho, Wo, 16, C]
    patches = patches.reshape(N * Ho * Wo, 16 * C)       # K index = (kh, kw, cin)
    return patches, N, Ho, Wo


def conv_block(x, w2, bias, stride, bn=None, act="leaky", out_dtype=jnp.bfloat16):
    patches, N, Ho, Wo = im2col(x.astype(jnp.bfloat16), stride)   # bf16 patches
    M, K = patches.shape
    Cout = w2.shape[1]
    bias = bias.astype(jnp.float32)

    # Pad a tiny Cout (the final 1-channel conv) to a full 128-lane tile so the
    # MXU and output stores stay dense; extra channels are sliced off below.
    c_real = Cout
    if Cout < 8:
        w2 = jnp.pad(w2, ((0, 0), (0, 128 - Cout)))
        bias = jnp.pad(bias, (0, 128 - Cout))
        Cout = 128

    tm = _choose_tm(M)
    Mp = _round_up(M, tm)
    if Mp != M:
        patches = jnp.pad(patches, ((0, Mp - M), (0, 0)))
    tk = _choose_tk(K)

    with_stats = bn is not None
    conv_out, stats = conv_matmul(
        patches, w2.astype(jnp.bfloat16), bias, tm, tk,
        act=None if with_stats else act,
        with_stats=with_stats,
        out_dtype=jnp.float32 if with_stats else out_dtype)

    if with_stats:
        gamma, beta = bn
        # Padded patch rows are all-zero => their conv output is exactly `bias`;
        # correct the fused partial sums so stats match the valid M rows only.
        n_pad = Mp - M
        sum_z = stats[:, 0, :].sum(axis=0) - n_pad * bias
        sum_zz = stats[:, 1, :].sum(axis=0) - n_pad * bias * bias
        mean = sum_z / M
        var = jnp.maximum(sum_zz / M - mean * mean, 0.0)   # biased batch variance
        scale = gamma * lax.rsqrt(var + 1e-5)
        shift = beta - mean * scale
        out = affine_leaky(conv_out, scale, shift, tm, out_dtype)
    else:
        out = conv_out

    return out[:M, :c_real].reshape(N, Ho, Wo, c_real)


def init_params(key, generate_airway_segmentation=False):
    in0 = 3 if generate_airway_segmentation else 2
    cfgs = [(in0, 64), (64, 128), (128, 256), (256, 512), (512, 1)]
    params = []
    for cin, cout in cfgs:
        key, kw, kb = jax.random.split(key, 3)
        fan_in = cin * 16
        bound = 1.0 / float(jnp.sqrt(fan_in))
        # Equivalent to a PyTorch weight [Cout, Cin, 4, 4] stored as [4, 4, Cin, Cout].
        w = jax.random.uniform(kw, (4, 4, cin, cout), jnp.float32, -bound, bound)
        b = jax.random.uniform(kb, (cout,), jnp.float32, -bound, bound)
        params.append({"w": w.reshape(16 * cin, cout), "b": b})
    for i in (1, 2, 3):  # conv2..conv4 have BatchNorm (gamma=1, beta=0 at init)
        c = cfgs[i][1]
        params[i]["gamma"] = jnp.ones((c,), jnp.float32)
        params[i]["beta"] = jnp.zeros((c,), jnp.float32)
    return params


def discriminator_forward(params, x, y):
    """x, y: NCHW tensors (PyTorch convention). Returns NCHW [N, 1, Ho, Wo]."""
    xy = jnp.concatenate([y, x], axis=1)                 # torch.cat([y, x], dim=1)
    h = jnp.transpose(xy, (0, 2, 3, 1)).astype(jnp.bfloat16)   # -> NHWC, bf16
    strides = (2, 2, 2, 1, 1)
    acts = ("leaky", "leaky", "leaky", "leaky", "sigmoid")
    n_layers = len(params)
    for i, p in enumerate(params):
        bn = (p["gamma"], p["beta"]) if "gamma" in p else None
        out_dtype = jnp.float32 if i == n_layers - 1 else jnp.bfloat16
        h = conv_block(h, p["w"], p["b"], strides[i], bn=bn, act=acts[i],
                       out_dtype=out_dtype)
    return jnp.transpose(h, (0, 3, 1, 2))                # -> NCHW


# ---------------------------------------------------------------------------
if __name__ == "__main__":
    key = jax.random.PRNGKey(0)
    k_params, kx, ky = jax.random.split(key, 3)

    # Small shapes: need H, W >= 24 so every 4x4/pad-1 conv stays valid; use 32.
    x = jax.random.normal(kx, (2, 1, 32, 32), jnp.float32)   # NCHW, like PyTorch
    y = jax.random.normal(ky, (2, 1, 32, 32), jnp.float32)

    params = init_params(k_params, generate_airway_segmentation=False)

    out = discriminator_forward(params, x, y)
    out = jax.block_until_ready(out)

    assert out.shape == (2, 1, 2, 2), out.shape
    assert bool(jnp.all((out >= 0.0) & (out <= 1.0))), "sigmoid output out of range"
    print("KERNEL_OK")
</pallas_src>

<mosaic_0001>
module attributes {stable_mosaic.version = 11 : i64} {
  func.func @kernel(%arg0: i32, %arg1: i32, %arg2: memref<512x32xbf16, #tpu.memory_space<vmem>>, %arg3: memref<32x64xbf16, #tpu.memory_space<vmem>>, %arg4: memref<1x64xf32, #tpu.memory_space<vmem>>, %arg5: memref<512x64xbf16, #tpu.memory_space<vmem>>, %arg6: memref<512x64xf32, #tpu.memory_space<vmem>>) attributes {dimension_semantics = [#tpu.dimension_semantics<parallel>, #tpu.dimension_semantics<arbitrary>], iteration_bounds = array<i64: 1, 1>, scalar_prefetch = 0 : i64, scratch_operands = 1 : i64, tpu.core_type = #tpu.core_type<tc>, window_params = [{transform_indices = @transform_0, window_bounds = array<i64: 512, 32>}, {transform_indices = @transform_1, window_bounds = array<i64: 32, 64>}, {pipeline_mode = #tpu.pipeline_mode<synchronous>, transform_indices = @transform_2, window_bounds = array<i64: 1, 64>}, {transform_indices = @transform_3, window_bounds = array<i64: 512, 64>}]} {
    %c0_i32 = arith.constant 0 : i32
    %0 = arith.cmpi eq, %arg1, %c0_i32 : i32
    %1 = arith.extui %0 : i1 to i32
    %c0_i32_0 = arith.constant 0 : i32
    %2 = arith.cmpi ne, %1, %c0_i32_0 : i32
    scf.if %2 {
      %cst_10 = arith.constant 0.000000e+00 : f32
      %12 = vector.broadcast %cst_10 : f32 to vector<512x64xf32>
      %c0_11 = arith.constant 0 : index
      %c0_12 = arith.constant 0 : index
      %13 = vector.load %arg6[%c0_11, %c0_12] : memref<512x64xf32, #tpu.memory_space<vmem>>, vector<512x64xf32>
      tpu.vector_store %arg6[%c0_11, %c0_12], %12 {strides = array<i32>} : memref<512x64xf32, #tpu.memory_space<vmem>>, vector<512x64xf32>,
    } else {
    }
    %c0 = arith.constant 0 : index
    %c0_1 = arith.constant 0 : index
    %3 = vector.load %arg6[%c0, %c0_1] : memref<512x64xf32, #tpu.memory_space<vmem>>, vector<512x64xf32>
    %c0_2 = arith.constant 0 : index
    %c0_3 = arith.constant 0 : index
    %4 = vector.load %arg2[%c0_2, %c0_3] : memref<512x32xbf16, #tpu.memory_space<vmem>>, vector<512x32xbf16>
    %c0_4 = arith.constant 0 : index
    %c0_5 = arith.constant 0 : index
    %5 = vector.load %arg3[%c0_4, %c0_5] : memref<32x64xbf16, #tpu.memory_space<vmem>>, vector<32x64xbf16>
    %cst = arith.constant dense<0.000000e+00> : vector<512x64xf32>
    %6 = tpu.matmul %4, %5, %cst {dimension_numbers = #tpu.dot_dimension_numbers<[1], [0], [0], [1], [0, 0, 1, 1], [], []>} : vector<512x32xbf16>, vector<32x64xbf16>, vector<512x64xf32> -> vector<512x64xf32>
    %7 = arith.addf %3, %6 : vector<512x64xf32>
    %c0_6 = arith.constant 0 : index
    %c0_7 = arith.constant 0 : index
    %8 = vector.load %arg6[%c0_6, %c0_7] : memref<512x64xf32, #tpu.memory_space<vmem>>, vector<512x64xf32>
    tpu.vector_store %arg6[%c0_6, %c0_7], %7 {strides = array<i32>} : memref<512x64xf32, #tpu.memory_space<vmem>>, vector<512x64xf32>,
    %c0_i32_8 = arith.constant 0 : i32
    %9 = arith.cmpi eq, %arg1, %c0_i32_8 : i32
    %10 = arith.extui %9 : i1 to i32
    %c0_i32_9 = arith.constant 0 : i32
    %11 = arith.cmpi ne, %10, %c0_i32_9 : i32
    scf.if %11 {
      %c0_10 = arith.constant 0 : index
      %c0_11 = arith.constant 0 : index
      %12 = vector.load %arg6[%c0_10, %c0_11] : memref<512x64xf32, #tpu.memory_space<vmem>>, vector<512x64xf32>
      %c0_12 = arith.constant 0 : index
      %c0_13 = arith.constant 0 : index
      %13 = vector.load %arg4[%c0_12, %c0_13] : memref<1x64xf32, #tpu.memory_space<vmem>>, vector<1x64xf32>
      %14 = vector.broadcast %13 : vector<1x64xf32> to vector<512x64xf32>
      %15 = arith.addf %12, %14 : vector<512x64xf32>
      %cst_14 = arith.constant 0.000000e+00 : f32
      %16 = vector.broadcast %cst_14 : f32 to vector<512x64xf32>
      %17 = arith.cmpf oge, %15, %16 : vector<512x64xf32>
      %cst_15 = arith.constant 2.000000e-01 : f32
      %18 = vector.broadcast %cst_15 : f32 to vector<512x64xf32>
      %19 = arith.mulf %18, %15 : vector<512x64xf32>
      %20 = arith.select %17, %15, %19 : vector<512x64xi1>, vector<512x64xf32>
      %21 = arith.truncf %20 : vector<512x64xf32> to vector<512x64xbf16>
      %c0_16 = arith.constant 0 : index
      %c0_17 = arith.constant 0 : index
      %22 = vector.load %arg5[%c0_16, %c0_17] : memref<512x64xbf16, #tpu.memory_space<vmem>>, vector<512x64xbf16>
      tpu.vector_store %arg5[%c0_16, %c0_17], %21 {strides = array<i32>} : memref<512x64xbf16, #tpu.memory_space<vmem>>, vector<512x64xbf16>,
    } else {
    }
    return
  }
  func.func @transform_0(%arg0: i32, %arg1: i32) -> (i32, i32) {
    %c0_i32 = arith.constant 0 : i32
    return %arg0, %arg1 : i32, i32
  }
  func.func @transform_1(%arg0: i32, %arg1: i32) -> (i32, i32) {
    %c0_i32 = arith.constant 0 : i32
    %c0_i32_0 = arith.constant 0 : i32
    return %arg1, %c0_i32 : i32, i32
  }
  func.func @transform_2(%arg0: i32, %arg1: i32) -> (i32, i32) {
    %c0_i32 = arith.constant 0 : i32
    %c0_i32_0 = arith.constant 0 : i32
    %c0_i32_1 = arith.constant 0 : i32
    return %c0_i32, %c0_i32_0 : i32, i32
  }
  func.func @transform_3(%arg0: i32, %arg1: i32) -> (i32, i32) {
    %c0_i32 = arith.constant 0 : i32
    %c0_i32_0 = arith.constant 0 : i32
    return %arg0, %c0_i32 : i32, i32
  }
}

</mosaic_0001>

<llo_original>
// kernel: tpu_custom_call.1
$region0: #{tpu_custom_call.1}
  #allocation0 [shape = 'u32[]', space=smem, size = 0x4, offset = 0x4, fixed_abs, tag = 'smem constant byte address 0x4 - core index']
  #allocation1 [shape = 'u32[144,128]{1,0:T(1,128)}', space=vmem, size = 0x12000, scoped, tag = 'internal scratch']
  #allocation2 [shape = 'f32[512,64]{1,0:T(8,128)}', space=vmem, size = 0x40000, scoped, tag = 'scratch operand']
  %s0 = inlined_call_operand.vmem [shape: bf16[512,32], index: 0, kind: input, shape index: {}]
  %s1 = inlined_call_operand.vmem [shape: bf16[32,64], index: 1, kind: input, shape index: {}]
  %s2 = inlined_call_operand.vmem [shape: f32[1,64], index: 2, kind: input, shape index: {}]
  %s3 = inlined_call_operand.vmem [shape: bf16[512,64], index: 3, kind: output, shape index: {}]
  %s4 = sld [smem:[#allocation0]]
  $region30: #{tpu_custom_call.1} parent=0
    _
  %s6 = ssub.s32 1, %s4
  %s7 = scalar_select 0, %s6, %s4
  // Predicated region
  $region2: #{tpu_custom_call.1} parent=0 // pred_check
    _
  $region3: #{tpu_custom_call.1} parent=0 // pred_check_branch
    %9 = sbr.rel (0) target = $region5
  $region4: #{tpu_custom_call.1} parent=0 // pred_region
    _
  $region5: #{tpu_custom_call.1} parent=0 // pred_fallthru
    _
  // Predicated region
  $region6: #{tpu_custom_call.1} parent=0 // pred_check
    _
  $region7: #{tpu_custom_call.1} parent=0 // pred_check_branch
    %11 = sbr.rel (0) target = $region9
  $region8: #{tpu_custom_call.1} parent=0 // pred_region
    _
  $region9: #{tpu_custom_call.1} parent=0 // pred_fallthru
    _
  // Predicated region
  $region10: #{tpu_custom_call.1} parent=0 // pred_check
    _
  $region11: #{tpu_custom_call.1} parent=0 // pred_check_branch
    %13 = sbr.rel (0) target = $region13
  $region12: #{tpu_custom_call.1} parent=0 // pred_region
    _
  $region13: #{tpu_custom_call.1} parent=0 // pred_fallthru
    _
  %p15 = scmp.eq.s32.totalorder 0, 0
  // Predicated region
  $region14: #{tpu_custom_call.1} parent=0 // pred_check
    %p16 = pneg %p15
  $region15: #{tpu_custom_call.1} parent=0 // pred_check_branch
    %18 = sbr.rel (%p16) target = $region17
  $region16: #{tpu_custom_call.1} parent=0 // pred_region
    %vm19 = vcmask 523264
    %20 = vst.msk [vmem:[#allocation2] sm:$0xff] %vm19, 0.0
    %21 = vst.msk [vmem:[#allocation2 + $0x8] sm:$0xff] %vm19, 0.0
    %22 = vst.msk [vmem:[#allocation2 + $0x10] sm:$0xff] %vm19, 0.0
    %23 = vst.msk [vmem:[#allocation2 + $0x18] sm:$0xff] %vm19, 0.0
    %24 = vst.msk [vmem:[#allocation2 + $0x20] sm:$0xff] %vm19, 0.0
    %25 = vst.msk [vmem:[#allocation2 + $0x28] sm:$0xff] %vm19, 0.0
    %26 = vst.msk [vmem:[#allocation2 + $0x30] sm:$0xff] %vm19, 0.0
    %27 = vst.msk [vmem:[#allocation2 + $0x38] sm:$0xff] %vm19, 0.0
    %28 = vst.msk [vmem:[#allocation2 + $0x40] sm:$0xff] %vm19, 0.0
    %29 = vst.msk [vmem:[#allocation2 + $0x48] sm:$0xff] %vm19, 0.0
    %30 = vst.msk [vmem:[#allocation2 + $0x50] sm:$0xff] %vm19, 0.0
    %31 = vst.msk [vmem:[#allocation2 + $0x58] sm:$0xff] %vm19, 0.0
    %32 = vst.msk [vmem:[#allocation2 + $0x60] sm:$0xff] %vm19, 0.0
    %33 = vst.msk [vmem:[#allocation2 + $0x68] sm:$0xff] %vm19, 0.0
    %34 = vst.msk [vmem:[#allocation2 + $0x70] sm:$0xff] %vm19, 0.0
    %35 = vst.msk [vmem:[#allocation2 + $0x78] sm:$0xff] %vm19, 0.0
    %36 = vst.msk [vmem:[#allocation2 + $0x80] sm:$0xff] %vm19, 0.0
    %37 = vst.msk [vmem:[#allocation2 + $0x88] sm:$0xff] %vm19, 0.0
    %38 = vst.msk [vmem:[#allocation2 + $0x90] sm:$0xff] %vm19, 0.0
    %39 = vst.msk [vmem:[#allocation2 + $0x98] sm:$0xff] %vm19, 0.0
    %40 = vst.msk [vmem:[#allocation2 + $0xa0] sm:$0xff] %vm19, 0.0
    %41 = vst.msk [vmem:[#allocation2 + $0xa8] sm:$0xff] %vm19, 0.0
    %42 = vst.msk [vmem:[#allocation2 + $0xb0] sm:$0xff] %vm19, 0.0
    %43 = vst.msk [vmem:[#allocation2 + $0xb8] sm:$0xff] %vm19, 0.0
    %44 = vst.msk [vmem:[#allocation2 + $0xc0] sm:$0xff] %vm19, 0.0
    %45 = vst.msk [vmem:[#allocation2 + $0xc8] sm:$0xff] %vm19, 0.0
    %46 = vst.msk [vmem:[#allocation2 + $0xd0] sm:$0xff] %vm19, 0.0
    %47 = vst.msk [vmem:[#allocation2 + $0xd8] sm:$0xff] %vm19, 0.0
    %48 = vst.msk [vmem:[#allocation2 + $0xe0] sm:$0xff] %vm19, 0.0
    %49 = vst.msk [vmem:[#allocation2 + $0xe8] sm:$0xff] %vm19, 0.0
    %50 = vst.msk [vmem:[#allocation2 + $0xf0] sm:$0xff] %vm19, 0.0
    %51 = vst.msk [vmem:[#allocation2 + $0xf8] sm:$0xff] %vm19, 0.0
    %52 = vst.msk [vmem:[#allocation2 + $0x100] sm:$0xff] %vm19, 0.0
    %53 = vst.msk [vmem:[#allocation2 + $0x108] sm:$0xff] %vm19, 0.0
    %54 = vst.msk [vmem:[#allocation2 + $0x110] sm:$0xff] %vm19, 0.0
    %55 = vst.msk [vmem:[#allocation2 + $0x118] sm:$0xff] %vm19, 0.0
    %56 = vst.msk [vmem:[#allocation2 + $0x120] sm:$0xff] %vm19, 0.0
    %57 = vst.msk [vmem:[#allocation2 + $0x128] sm:$0xff] %vm19, 0.0
    %58 = vst.msk [vmem:[#allocation2 + $0x130] sm:$0xff] %vm19, 0.0
    %59 = vst.msk [vmem:[#allocation2 + $0x138] sm:$0xff] %vm19, 0.0
    %60 = vst.msk [vmem:[#allocation2 + $0x140] sm:$0xff] %vm19, 0.0
    %61 = vst.msk [vmem:[#allocation2 + $0x148] sm:$0xff] %vm19, 0.0
    %62 = vst.msk [vmem:[#allocation2 + $0x150] sm:$0xff] %vm19, 0.0
    %63 = vst.msk [vmem:[#allocation2 + $0x158] sm:$0xff] %vm19, 0.0
    %64 = vst.msk [vmem:[#allocation2 + $0x160] sm:$0xff] %vm19, 0.0
    %65 = vst.msk [vmem:[#allocation2 + $0x168] sm:$0xff] %vm19, 0.0
    %66 = vst.msk [vmem:[#allocation2 + $0x170] sm:$0xff] %vm19, 0.0
    %67 = vst.msk [vmem:[#allocation2 + $0x178] sm:$0xff] %vm19, 0.0
    %68 = vst.msk [vmem:[#allocation2 + $0x180] sm:$0xff] %vm19, 0.0
    %69 = vst.msk [vmem:[#allocation2 + $0x188] sm:$0xff] %vm19, 0.0
    %70 = vst.msk [vmem:[#allocation2 + $0x190] sm:$0xff] %vm19, 0.0
    %71 = vst.msk [vmem:[#allocation2 + $0x198] sm:$0xff] %vm19, 0.0
    %72 = vst.msk [vmem:[#allocation2 + $0x1a0] sm:$0xff] %vm19, 0.0
    %73 = vst.msk [vmem:[#allocation2 + $0x1a8] sm:$0xff] %vm19, 0.0
    %74 = vst.msk [vmem:[#allocation2 + $0x1b0] sm:$0xff] %vm19, 0.0
    %75 = vst.msk [vmem:[#allocation2 + $0x1b8] sm:$0xff] %vm19, 0.0
    %76 = vst.msk [vmem:[#allocation2 + $0x1c0] sm:$0xff] %vm19, 0.0
    %77 = vst.msk [vmem:[#allocation2 + $0x1c8] sm:$0xff] %vm19, 0.0
    %78 = vst.msk [vmem:[#allocation2 + $0x1d0] sm:$0xff] %vm19, 0.0
    %79 = vst.msk [vmem:[#allocation2 + $0x1d8] sm:$0xff] %vm19, 0.0
    %80 = vst.msk [vmem:[#allocation2 + $0x1e0] sm:$0xff] %vm19, 0.0
    %81 = vst.msk [vmem:[#allocation2 + $0x1e8] sm:$0xff] %vm19, 0.0
    %82 = vst.msk [vmem:[#allocation2 + $0x1f0] sm:$0xff] %vm19, 0.0
    %83 = vst.msk [vmem:[#allocation2 + $0x1f8] sm:$0xff] %vm19, 0.0
  $region17: #{tpu_custom_call.1} parent=0 // pred_fallthru
    _
  %v84 = vld [vmem:[#allocation2] sm:$0xff]
  %v85 = vld [vmem:[#allocation2 + $0x8] sm:$0xff]
  %v86 = vld [vmem:[#allocation2 + $0x10] sm:$0xff]
  %v87 = vld [vmem:[#allocation2 + $0x18] sm:$0xff]
  %v88 = vld [vmem:[#allocation2 + $0x20] sm:$0xff]
  %v89 = vld [vmem:[#allocation2 + $0x28] sm:$0xff]
  %v90 = vld [vmem:[#allocation2 + $0x30] sm:$0xff]
  %v91 = vld [vmem:[#allocation2 + $0x38] sm:$0xff]
  %v92 = vld [vmem:[#allocation2 + $0x40] sm:$0xff]
  %v93 = vld [vmem:[#allocation2 + $0x48] sm:$0xff]
  %v94 = vld [vmem:[#allocation2 + $0x50] sm:$0xff]
  %v95 = vld [vmem:[#allocation2 + $0x58] sm:$0xff]
  %v96 = vld [vmem:[#allocation2 + $0x60] sm:$0xff]
  %v97 = vld [vmem:[#allocation2 + $0x68] sm:$0xff]
  %v98 = vld [vmem:[#allocation2 + $0x70] sm:$0xff]
  %v99 = vld [vmem:[#allocation2 + $0x78] sm:$0xff]
  %v100 = vld [vmem:[#allocation2 + $0x80] sm:$0xff]
  %v101 = vld [vmem:[#allocation2 + $0x88] sm:$0xff]
  %v102 = vld [vmem:[#allocation2 + $0x90] sm:$0xff]
  %v103 = vld [vmem:[#allocation2 + $0x98] sm:$0xff]
  %v104 = vld [vmem:[#allocation2 + $0xa0] sm:$0xff]
  %v105 = vld [vmem:[#allocation2 + $0xa8] sm:$0xff]
  %v106 = vld [vmem:[#allocation2 + $0xb0] sm:$0xff]
  %v107 = vld [vmem:[#allocation2 + $0xb8] sm:$0xff]
  %v108 = vld [vmem:[#allocation2 + $0xc0] sm:$0xff]
  %v109 = vld [vmem:[#allocation2 + $0xc8] sm:$0xff]
  %v110 = vld [vmem:[#allocation2 + $0xd0] sm:$0xff]
  %v111 = vld [vmem:[#allocation2 + $0xd8] sm:$0xff]
  %v112 = vld [vmem:[#allocation2 + $0xe0] sm:$0xff]
  %v113 = vld [vmem:[#allocation2 + $0xe8] sm:$0xff]
  %v114 = vld [vmem:[#allocation2 + $0xf0] sm:$0xff]
  %v115 = vld [vmem:[#allocation2 + $0xf8] sm:$0xff]
  %v116 = vld [vmem:[#allocation2 + $0x100] sm:$0xff]
  %v117 = vld [vmem:[#allocation2 + $0x108] sm:$0xff]
  %v118 = vld [vmem:[#allocation2 + $0x110] sm:$0xff]
  %v119 = vld [vmem:[#allocation2 + $0x118] sm:$0xff]
  %v120 = vld [vmem:[#allocation2 + $0x120] sm:$0xff]
  %v121 = vld [vmem:[#allocation2 + $0x128] sm:$0xff]
  %v122 = vld [vmem:[#allocation2 + $0x130] sm:$0xff]
  %v123 = vld [vmem:[#allocation2 + $0x138] sm:$0xff]
  %v124 = vld [vmem:[#allocation2 + $0x140] sm:$0xff]
  %v125 = vld [vmem:[#allocation2 + $0x148] sm:$0xff]
  %v126 = vld [vmem:[#allocation2 + $0x150] sm:$0xff]
  %v127 = vld [vmem:[#allocation2 + $0x158] sm:$0xff]
  %v128 = vld [vmem:[#allocation2 + $0x160] sm:$0xff]
  %v129 = vld [vmem:[#allocation2 + $0x168] sm:$0xff]
  %v130 = vld [vmem:[#allocation2 + $0x170] sm:$0xff]
  %v131 = vld [vmem:[#allocation2 + $0x178] sm:$0xff]
  %v132 = vld [vmem:[#allocation2 + $0x180] sm:$0xff]
  %v133 = vld [vmem:[#allocation2 + $0x188] sm:$0xff]
  %v134 = vld [vmem:[#allocation2 + $0x190] sm:$0xff]
  %v135 = vld [vmem:[#allocation2 + $0x198] sm:$0xff]
  %v136 = vld [vmem:[#allocation2 + $0x1a0] sm:$0xff]
  %v137 = vld [vmem:[#allocation2 + $0x1a8] sm:$0xff]
  %v138 = vld [vmem:[#allocation2 + $0x1b0] sm:$0xff]
  %v139 = vld [vmem:[#allocation2 + $0x1b8] sm:$0xff]
  %v140 = vld [vmem:[#allocation2 + $0x1c0] sm:$0xff]
  %v141 = vld [vmem:[#allocation2 + $0x1c8] sm:$0xff]
  %v142 = vld [vmem:[#allocation2 + $0x1d0] sm:$0xff]
  %v143 = vld [vmem:[#allocation2 + $0x1d8] sm:$0xff]
  %v144 = vld [vmem:[#allocation2 + $0x1e0] sm:$0xff]
  %v145 = vld [vmem:[#allocation2 + $0x1e8] sm:$0xff]
  %v146 = vld [vmem:[#allocation2 + $0x1f0] sm:$0xff]
  %v147 = vld [vmem:[#allocation2 + $0x1f8] sm:$0xff]
  %v148 = vld [vmem:[%s0] sm:$0xf]
  %v149 = vld [vmem:[%s0 + $0x4] sm:$0xf]
  %v150 = vld [vmem:[%s0 + $0x8] sm:$0xf]
  %v151 = vld [vmem:[%s0 + $0xc] sm:$0xf]
  %v152 = vld [vmem:[%s0 + $0x10] sm:$0xf]
  %v153 = vld [vmem:[%s0 + $0x14] sm:$0xf]
  %v154 = vld [vmem:[%s0 + $0x18] sm:$0xf]
  %v155 = vld [vmem:[%s0 + $0x1c] sm:$0xf]
  %v156 = vld [vmem:[%s0 + $0x20] sm:$0xf]
  %v157 = vld [vmem:[%s0 + $0x24] sm:$0xf]
  %v158 = vld [vmem:[%s0 + $0x28] sm:$0xf]
  %v159 = vld [vmem:[%s0 + $0x2c] sm:$0xf]
  %v160 = vld [vmem:[%s0 + $0x30] sm:$0xf]
  %v161 = vld [vmem:[%s0 + $0x34] sm:$0xf]
  %v162 = vld [vmem:[%s0 + $0x38] sm:$0xf]
  %v163 = vld [vmem:[%s0 + $0x3c] sm:$0xf]
  %v164 = vld [vmem:[%s0 + $0x40] sm:$0xf]
  %v165 = vld [vmem:[%s0 + $0x44] sm:$0xf]
  %v166 = vld [vmem:[%s0 + $0x48] sm:$0xf]
  %v167 = vld [vmem:[%s0 + $0x4c] sm:$0xf]
  %v168 = vld [vmem:[%s0 + $0x50] sm:$0xf]
  %v169 = vld [vmem:[%s0 + $0x54] sm:$0xf]
  %v170 = vld [vmem:[%s0 + $0x58] sm:$0xf]
  %v171 = vld [vmem:[%s0 + $0x5c] sm:$0xf]
  %v172 = vld [vmem:[%s0 + $0x60] sm:$0xf]
  %v173 = vld [vmem:[%s0 + $0x64] sm:$0xf]
  %v174 = vld [vmem:[%s0 + $0x68] sm:$0xf]
  %v175 = vld [vmem:[%s0 + $0x6c] sm:$0xf]
  %v176 = vld [vmem:[%s0 + $0x70] sm:$0xf]
  %v177 = vld [vmem:[%s0 + $0x74] sm:$0xf]
  %v178 = vld [vmem:[%s0 + $0x78] sm:$0xf]
  %v179 = vld [vmem:[%s0 + $0x7c] sm:$0xf]
  %v180 = vld [vmem:[%s0 + $0x80] sm:$0xf]
  %v181 = vld [vmem:[%s0 + $0x84] sm:$0xf]
  %v182 = vld [vmem:[%s0 + $0x88] sm:$0xf]
  %v183 = vld [vmem:[%s0 + $0x8c] sm:$0xf]
  %v184 = vld [vmem:[%s0 + $0x90] sm:$0xf]
  %v185 = vld [vmem:[%s0 + $0x94] sm:$0xf]
  %v186 = vld [vmem:[%s0 + $0x98] sm:$0xf]
  %v187 = vld [vmem:[%s0 + $0x9c] sm:$0xf]
  %v188 = vld [vmem:[%s0 + $0xa0] sm:$0xf]
  %v189 = vld [vmem:[%s0 + $0xa4] sm:$0xf]
  %v190 = vld [vmem:[%s0 + $0xa8] sm:$0xf]
  %v191 = vld [vmem:[%s0 + $0xac] sm:$0xf]
  %v192 = vld [vmem:[%s0 + $0xb0] sm:$0xf]
  %v193 = vld [vmem:[%s0 + $0xb4] sm:$0xf]
  %v194 = vld [vmem:[%s0 + $0xb8] sm:$0xf]
  %v195 = vld [vmem:[%s0 + $0xbc] sm:$0xf]
  %v196 = vld [vmem:[%s0 + $0xc0] sm:$0xf]
  %v197 = vld [vmem:[%s0 + $0xc4] sm:$0xf]
  %v198 = vld [vmem:[%s0 + $0xc8] sm:$0xf]
  %v199 = vld [vmem:[%s0 + $0xcc] sm:$0xf]
  %v200 = vld [vmem:[%s0 + $0xd0] sm:$0xf]
  %v201 = vld [vmem:[%s0 + $0xd4] sm:$0xf]
  %v202 = vld [vmem:[%s0 + $0xd8] sm:$0xf]
  %v203 = vld [vmem:[%s0 + $0xdc] sm:$0xf]
  %v204 = vld [vmem:[%s0 + $0xe0] sm:$0xf]
  %v205 = vld [vmem:[%s0 + $0xe4] sm:$0xf]
  %v206 = vld [vmem:[%s0 + $0xe8] sm:$0xf]
  %v207 = vld [vmem:[%s0 + $0xec] sm:$0xf]
  %v208 = vld [vmem:[%s0 + $0xf0] sm:$0xf]
  %v209 = vld [vmem:[%s0 + $0xf4] sm:$0xf]
  %v210 = vld [vmem:[%s0 + $0xf8] sm:$0xf]
  %v211 = vld [vmem:[%s0 + $0xfc] sm:$0xf]
  %v212 = vld [vmem:[%s1] sm:$0xf]
  %v213 = vld [vmem:[%s1 + $0x4] sm:$0xf]
  %v214 = vld [vmem:[%s1 + $0x8] sm:$0xf]
  %v215 = vld [vmem:[%s1 + $0xc] sm:$0xf]
  %v280 = vunpack.c.l.b16 %v148
  %v281 = vunpack.c.l.b16 %v149
  %v282 = vunpack.c.l.b16 %v150
  %v283 = vunpack.c.l.b16 %v151
  %v284 = vunpack.c.l.b16 %v152
  %v285 = vunpack.c.l.b16 %v153
  %v286 = vunpack.c.l.b16 %v154
  %v287 = vunpack.c.l.b16 %v155
  %v288 = vunpack.c.l.b16 %v156
  %v289 = vunpack.c.l.b16 %v157
  %v290 = vunpack.c.l.b16 %v158
  %v291 = vunpack.c.l.b16 %v159
  %v292 = vunpack.c.l.b16 %v160
  %v293 = vunpack.c.l.b16 %v161
  %v294 = vunpack.c.l.b16 %v162
  %v295 = vunpack.c.l.b16 %v163
  %v296 = vunpack.c.l.b16 %v164
  %v297 = vunpack.c.l.b16 %v165
  %v298 = vunpack.c.l.b16 %v166
  %v299 = vunpack.c.l.b16 %v167
  %v300 = vunpack.c.l.b16 %v168
  %v301 = vunpack.c.l.b16 %v169
  %v302 = vunpack.c.l.b16 %v170
  %v303 = vunpack.c.l.b16 %v171
  %v304 = vunpack.c.l.b16 %v172
  %v305 = vunpack.c.l.b16 %v173
  %v306 = vunpack.c.l.b16 %v174
  %v307 = vunpack.c.l.b16 %v175
  %v308 = vunpack.c.l.b16 %v176
  %v309 = vunpack.c.l.b16 %v177
  %v310 = vunpack.c.l.b16 %v178
  %v311 = vunpack.c.l.b16 %v179
  %v312 = vunpack.c.l.b16 %v180
  %v313 = vunpack.c.l.b16 %v181
  %v314 = vunpack.c.l.b16 %v182
  %v315 = vunpack.c.l.b16 %v183
  %v316 = vunpack.c.l.b16 %v184
  %v317 = vunpack.c.l.b16 %v185
  %v318 = vunpack.c.l.b16 %v186
  %v319 = vunpack.c.l.b16 %v187
  %v320 = vunpack.c.l.b16 %v188
  %v321 = vunpack.c.l.b16 %v189
  %v322 = vunpack.c.l.b16 %v190
  %v323 = vunpack.c.l.b16 %v191
  %v324 = vunpack.c.l.b16 %v192
  %v325 = vunpack.c.l.b16 %v193
  %v326 = vunpack.c.l.b16 %v194
  %v327 = vunpack.c.l.b16 %v195
  %v328 = vunpack.c.l.b16 %v196
  %v329 = vunpack.c.l.b16 %v197
  %v330 = vunpack.c.l.b16 %v198
  %v331 = vunpack.c.l.b16 %v199
  %v332 = vunpack.c.l.b16 %v200
  %v333 = vunpack.c.l.b16 %v201
  %v334 = vunpack.c.l.b16 %v202
  %v335 = vunpack.c.l.b16 %v203
  %v336 = vunpack.c.l.b16 %v204
  %v337 = vunpack.c.l.b16 %v205
  %v338 = vunpack.c.l.b16 %v206
  %v339 = vunpack.c.l.b16 %v207
  %v340 = vunpack.c.l.b16 %v208
  %v341 = vunpack.c.l.b16 %v209
  %v342 = vunpack.c.l.b16 %v210
  %v343 = vunpack.c.l.b16 %v211
  %v344 = vpack.c.b16 %v281, %v280
  %v345 = vpack.c.b16 %v283, %v282
  %v346 = vpack.c.b16 %v285, %v284
  %v347 = vpack.c.b16 %v287, %v286
  %v348 = vpack.c.b16 %v289, %v288
  %v349 = vpack.c.b16 %v291, %v290
  %v350 = vpack.c.b16 %v293, %v292
  %v351 = vpack.c.b16 %v295, %v294
  %v352 = vpack.c.b16 %v297, %v296
  %v353 = vpack.c.b16 %v299, %v298
  %v354 = vpack.c.b16 %v301, %v300
  %v355 = vpack.c.b16 %v303, %v302
  %v356 = vpack.c.b16 %v305, %v304
  %v357 = vpack.c.b16 %v307, %v306
  %v358 = vpack.c.b16 %v309, %v308
  %v359 = vpack.c.b16 %v311, %v310
  %v360 = vpack.c.b16 %v313, %v312
  %v361 = vpack.c.b16 %v315, %v314
  %v362 = vpack.c.b16 %v317, %v316
  %v363 = vpack.c.b16 %v319, %v318
  %v364 = vpack.c.b16 %v321, %v320
  %v365 = vpack.c.b16 %v323, %v322
  %v366 = vpack.c.b16 %v325, %v324
  %v367 = vpack.c.b16 %v327, %v326
  %v368 = vpack.c.b16 %v329, %v328
  %v369 = vpack.c.b16 %v331, %v330
  %v370 = vpack.c.b16 %v333, %v332
  %v371 = vpack.c.b16 %v335, %v334
  %v372 = vpack.c.b16 %v337, %v336
  %v373 = vpack.c.b16 %v339, %v338
  %v374 = vpack.c.b16 %v341, %v340
  %v375 = vpack.c.b16 %v343, %v342
  %v380 = vunpack.c.l.b16 %v212
  %v381 = vunpack.c.l.b16 %v213
  %v382 = vunpack.c.l.b16 %v214
  %v383 = vunpack.c.l.b16 %v215
  %v384 = vpack.c.b16 %v381, %v380
  %v385 = vpack.c.b16 %v383, %v382
  %vm388 = vcmask 261120
  %v390 = vsel %vm388, %v344, 0
  %v393 = vsel %vm388, %v345, 0
  %v396 = vsel %vm388, %v346, 0
  %v399 = vsel %vm388, %v347, 0
  %v402 = vsel %vm388, %v348, 0
  %v405 = vsel %vm388, %v349, 0
  %v408 = vsel %vm388, %v350, 0
  %v411 = vsel %vm388, %v351, 0
  %v414 = vsel %vm388, %v352, 0
  %v417 = vsel %vm388, %v353, 0
  %v420 = vsel %vm388, %v354, 0
  %v423 = vsel %vm388, %v355, 0
  %v426 = vsel %vm388, %v356, 0
  %v429 = vsel %vm388, %v357, 0
  %v432 = vsel %vm388, %v358, 0
  %v435 = vsel %vm388, %v359, 0
  %v438 = vsel %vm388, %v360, 0
  %v441 = vsel %vm388, %v361, 0
  %v444 = vsel %vm388, %v362, 0
  %v447 = vsel %vm388, %v363, 0
  %v450 = vsel %vm388, %v364, 0
  %v453 = vsel %vm388, %v365, 0
  %v456 = vsel %vm388, %v366, 0
  %v459 = vsel %vm388, %v367, 0
  %v462 = vsel %vm388, %v368, 0
  %v465 = vsel %vm388, %v369, 0
  %v468 = vsel %vm388, %v370, 0
  %v471 = vsel %vm388, %v371, 0
  %v474 = vsel %vm388, %v372, 0
  %v477 = vsel %vm388, %v373, 0
  %v480 = vsel %vm388, %v374, 0
  %v483 = vsel %vm388, %v375, 0
  %485 = vmatprep.subr.bf16.mxu0 0
  %486 = vmatpush1.bf16.msra.mxu0 %v384
  %487 = vmatprep.subr.bf16.mxu0 0
  %488 = vmatpush1.bf16.msra.mxu0 %v385
  %489 = vmatprep.subr.bf16.mxu0 0
  %490 = vmatpush1.bf16.msra.mxu0 0
  %491 = vmatprep.subr.bf16.mxu0 0
  %492 = vmatpush1.bf16.msra.mxu0 0
  %493 = vmatprep.subr.bf16.mxu0 0
  %494 = vmatpush1.bf16.msra.mxu0 0
  %495 = vmatprep.subr.bf16.mxu0 0
  %496 = vmatpush1.bf16.msra.mxu0 0
  %497 = vmatprep.subr.bf16.mxu0 0
  %498 = vmatpush1.bf16.msra.mxu0 0
  %499 = vmatprep.subr.bf16.mxu0 0
  %500 = vmatpush1.bf16.msra.mxu0 0
  %501 = vmatprep.subr.bf16.mxu0 0
  %502 = vmatpush1.bf16.msra.mxu0 0
  %503 = vmatprep.subr.bf16.mxu0 0
  %504 = vmatpush1.bf16.msra.mxu0 0
  %505 = vmatprep.subr.bf16.mxu0 0
  %506 = vmatpush1.bf16.msra.mxu0 0
  %507 = vmatprep.subr.bf16.mxu0 0
  %508 = vmatpush1.bf16.msra.mxu0 0
  %509 = vmatprep.subr.bf16.mxu0 0
  %510 = vmatpush1.bf16.msra.mxu0 0
  %511 = vmatprep.subr.bf16.mxu0 0
  %512 = vmatpush1.bf16.msra.mxu0 0
  %513 = vmatprep.subr.bf16.mxu0 0
  %514 = vmatpush1.bf16.msra.mxu0 0
  %515 = vmatprep.subr.bf16.mxu0 0
  %516 = vmatpush1.bf16.msra.mxu0 0
  %517 = vmatprep.mubr.bf16.mxu0 0
  %518 = vmatmul.mubr.bf16.gmra.mrb[0].mxu0 %v390
  %v519 = vpop.f32.mrb[0].mxu0
  %v520 = vadd.f32 0.0, %v519
  %v521 = vpop.f32.mrb[0].mxu0
  %v522 = vpop.f32.mrb[0].mxu0
  %v523 = vadd.f32 0.0, %v522
  %v524 = vpop.f32.mrb[0].mxu0
  %525 = vmatprep.mubr.bf16.mxu0 0
  %526 = vmatmul.mubr.bf16.gmra.mrb[0].mxu0 %v393
  %v527 = vpop.f32.mrb[0].mxu0
  %v528 = vadd.f32 0.0, %v527
  %v529 = vpop.f32.mrb[0].mxu0
  %v530 = vpop.f32.mrb[0].mxu0
  %v531 = vadd.f32 0.0, %v530
  %v532 = vpop.f32.mrb[0].mxu0
  %533 = vmatprep.mubr.bf16.mxu0 0
  %534 = vmatmul.mubr.bf16.gmra.mrb[0].mxu0 %v396
  %v535 = vpop.f32.mrb[0].mxu0
  %v536 = vadd.f32 0.0, %v535
  %v537 = vpop.f32.mrb[0].mxu0
  %v538 = vpop.f32.mrb[0].mxu0
  %v539 = vadd.f32 0.0, %v538
  %v540 = vpop.f32.mrb[0].mxu0
  %541 = vmatprep.mubr.bf16.mxu0 0
  %542 = vmatmul.mubr.bf16.gmra.mrb[0].mxu0 %v399
  %v543 = vpop.f32.mrb[0].mxu0
  %v544 = vadd.f32 0.0, %v543
  %v545 = vpop.f32.mrb[0].mxu0
  %v546 = vpop.f32.mrb[0].mxu0
  %v547 = vadd.f32 0.0, %v546
  %v548 = vpop.f32.mrb[0].mxu0
  %549 = vmatprep.mubr.bf16.mxu0 0
  %550 = vmatmul.mubr.bf16.gmra.mrb[0].mxu0 %v402
  %v551 = vpop.f32.mrb[0].mxu0
  %v552 = vadd.f32 0.0, %v551
  %v553 = vpop.f32.mrb[0].mxu0
  %v554 = vpop.f32.mrb[0].mxu0
  %v555 = vadd.f32 0.0, %v554
  %v556 = vpop.f32.mrb[0].mxu0
  %557 = vmatprep.mubr.bf16.mxu0 0
  %558 = vmatmul.mubr.bf16.gmra.mrb[0].mxu0 %v405
  %v559 = vpop.f32.mrb[0].mxu0
  %v560 = vadd.f32 0.0, %v559
  %v561 = vpop.f32.mrb[0].mxu0
  %v562 = vpop.f32.mrb[0].mxu0
  %v563 = vadd.f32 0.0, %v562
  %v564 = vpop.f32.mrb[0].mxu0
  %565 = vmatprep.mubr.bf16.mxu0 0
  %566 = vmatmul.mubr.bf16.gmra.mrb[0].mxu0 %v408
  %v567 = vpop.f32.mrb[0].mxu0
  %v568 = vadd.f32 0.0, %v567
  %v569 = vpop.f32.mrb[0].mxu0
  %v570 = vpop.f32.mrb[0].mxu0
  %v571 = vadd.f32 0.0, %v570
  %v572 = vpop.f32.mrb[0].mxu0
  %573 = vmatprep.mubr.bf16.mxu0 0
  %574 = vmatmul.mubr.bf16.gmra.mrb[0].mxu0 %v411
  %v575 = vpop.f32.mrb[0].mxu0
  %v576 = vadd.f32 0.0, %v575
  %v577 = vpop.f32.mrb[0].mxu0
  %v578 = vpop.f32.mrb[0].mxu0
  %v579 = vadd.f32 0.0, %v578
  %v580 = vpop.f32.mrb[0].mxu0
  %581 = vmatprep.mubr.bf16.mxu0 0
  %582 = vmatmul.mubr.bf16.gmra.mrb[0].mxu0 %v414
  %v583 = vpop.f32.mrb[0].mxu0
  %v584 = vadd.f32 0.0, %v583
  %v585 = vpop.f32.mrb[0].mxu0
  %v586 = vpop.f32.mrb[0].mxu0
  %v587 = vadd.f32 0.0, %v586
  %v588 = vpop.f32.mrb[0].mxu0
  %589 = vmatprep.mubr.bf16.mxu0 0
  %590 = vmatmul.mubr.bf16.gmra.mrb[0].mxu0 %v417
  %v591 = vpop.f32.mrb[0].mxu0
  %v592 = vadd.f32 0.0, %v591
  %v593 = vpop.f32.mrb[0].mxu0
  %v594 = vpop.f32.mrb[0].mxu0
  %v595 = vadd.f32 0.0, %v594
  %v596 = vpop.f32.mrb[0].mxu0
  %597 = vmatprep.mubr.bf16.mxu0 0
  %598 = vmatmul.mubr.bf16.gmra.mrb[0].mxu0 %v420
  %v599 = vpop.f32.mrb[0].mxu0
  %v600 = vadd.f32 0.0, %v599
  %v601 = vpop.f32.mrb[0].mxu0
  %v602 = vpop.f32.mrb[0].mxu0
  %v603 = vadd.f32 0.0, %v602
  %v604 = vpop.f32.mrb[0].mxu0
  %605 = vmatprep.mubr.bf16.mxu0 0
  %606 = vmatmul.mubr.bf16.gmra.mrb[0].mxu0 %v423
  %v607 = vpop.f32.mrb[0].mxu0
  %v608 = vadd.f32 0.0, %v607
  %v609 = vpop.f32.mrb[0].mxu0
  %v610 = vpop.f32.mrb[0].mxu0
  %v611 = vadd.f32 0.0, %v610
  %v612 = vpop.f32.mrb[0].mxu0
  %613 = vmatprep.mubr.bf16.mxu0 0
  %614 = vmatmul.mubr.bf16.gmra.mrb[0].mxu0 %v426
  %v615 = vpop.f32.mrb[0].mxu0
  %v616 = vadd.f32 0.0, %v615
  %v617 = vpop.f32.mrb[0].mxu0
  %v618 = vpop.f32.mrb[0].mxu0
  %v619 = vadd.f32 0.0, %v618
  %v620 = vpop.f32.mrb[0].mxu0
  %621 = vmatprep.mubr.bf16.mxu0 0
  %622 = vmatmul.mubr.bf16.gmra.mrb[0].mxu0 %v429
  %v623 = vpop.f32.mrb[0].mxu0
  %v624 = vadd.f32 0.0, %v623
  %v625 = vpop.f32.mrb[0].mxu0
  %v626 = vpop.f32.mrb[0].mxu0
  %v627 = vadd.f32 0.0, %v626
  %v628 = vpop.f32.mrb[0].mxu0
  %629 = vmatprep.mubr.bf16.mxu0 0
  %630 = vmatmul.mubr.bf16.gmra.mrb[0].mxu0 %v432
  %v631 = vpop.f32.mrb[0].mxu0
  %v632 = vadd.f32 0.0, %v631
  %v633 = vpop.f32.mrb[0].mxu0
  %v634 = vpop.f32.mrb[0].mxu0
  %v635 = vadd.f32 0.0, %v634
  %v636 = vpop.f32.mrb[0].mxu0
  %637 = vmatprep.mubr.bf16.mxu0 0
  %638 = vmatmul.mubr.bf16.gmra.mrb[0].mxu0 %v435
  %v639 = vpop.f32.mrb[0].mxu0
  %v640 = vadd.f32 0.0, %v639
  %v641 = vpop.f32.mrb[0].mxu0
  %v642 = vpop.f32.mrb[0].mxu0
  %v643 = vadd.f32 0.0, %v642
  %v644 = vpop.f32.mrb[0].mxu0
  %645 = vmatprep.mubr.bf16.mxu0 0
  %646 = vmatmul.mubr.bf16.gmra.mrb[0].mxu0 %v438
  %v647 = vpop.f32.mrb[0].mxu0
  %v648 = vadd.f32 0.0, %v647
  %v649 = vpop.f32.mrb[0].mxu0
  %v650 = vpop.f32.mrb[0].mxu0
  %v651 = vadd.f32 0.0, %v650
  %v652 = vpop.f32.mrb[0].mxu0
  %653 = vmatprep.mubr.bf16.mxu0 0
  %654 = vmatmul.mubr.bf16.gmra.mrb[0].mxu0 %v441
  %v655 = vpop.f32.mrb[0].mxu0
  %v656 = vadd.f32 0.0, %v655
  %v657 = vpop.f32.mrb[0].mxu0
  %v658 = vpop.f32.mrb[0].mxu0
  %v659 = vadd.f32 0.0, %v658
  %v660 = vpop.f32.mrb[0].mxu0
  %661 = vmatprep.mubr.bf16.mxu0 0
  %662 = vmatmul.mubr.bf16.gmra.mrb[0].mxu0 %v444
  %v663 = vpop.f32.mrb[0].mxu0
  %v664 = vadd.f32 0.0, %v663
  %v665 = vpop.f32.mrb[0].mxu0
  %v666 = vpop.f32.mrb[0].mxu0
  %v667 = vadd.f32 0.0, %v666
  %v668 = vpop.f32.mrb[0].mxu0
  %669 = vmatprep.mubr.bf16.mxu0 0
  %670 = vmatmul.mubr.bf16.gmra.mrb[0].mxu0 %v447
  %v671 = vpop.f32.mrb[0].mxu0
  %v672 = vadd.f32 0.0, %v671
  %v673 = vpop.f32.mrb[0].mxu0
  %v674 = vpop.f32.mrb[0].mxu0
  %v675 = vadd.f32 0.0, %v674
  %v676 = vpop.f32.mrb[0].mxu0
  %677 = vmatprep.mubr.bf16.mxu0 0
  %678 = vmatmul.mubr.bf16.gmra.mrb[0].mxu0 %v450
  %v679 = vpop.f32.mrb[0].mxu0
  %v680 = vadd.f32 0.0, %v679
  %v681 = vpop.f32.mrb[0].mxu0
  %v682 = vpop.f32.mrb[0].mxu0
  %v683 = vadd.f32 0.0, %v682
  %v684 = vpop.f32.mrb[0].mxu0
  %685 = vmatprep.mubr.bf16.mxu0 0
  %686 = vmatmul.mubr.bf16.gmra.mrb[0].mxu0 %v453
  %v687 = vpop.f32.mrb[0].mxu0
  %v688 = vadd.f32 0.0, %v687
  %v689 = vpop.f32.mrb[0].mxu0
  %v690 = vpop.f32.mrb[0].mxu0
  %v691 = vadd.f32 0.0, %v690
  %v692 = vpop.f32.mrb[0].mxu0
  %693 = vmatprep.mubr.bf16.mxu0 0
  %694 = vmatmul.mubr.bf16.gmra.mrb[0].mxu0 %v456
  %v695 = vpop.f32.mrb[0].mxu0
  %v696 = vadd.f32 0.0, %v695
  %v697 = vpop.f32.mrb[0].mxu0
  %v698 = vpop.f32.mrb[0].mxu0
  %v699 = vadd.f32 0.0, %v698
  %v700 = vpop.f32.mrb[0].mxu0
  %701 = vmatprep.mubr.bf16.mxu0 0
  %702 = vmatmul.mubr.bf16.gmra.mrb[0].mxu0 %v459
  %v703 = vpop.f32.mrb[0].mxu0
  %v704 = vadd.f32 0.0, %v703
  %v705 = vpop.f32.mrb[0].mxu0
  %v706 = vpop.f32.mrb[0].mxu0
  %v707 = vadd.f32 0.0, %v706
  %v708 = vpop.f32.mrb[0].mxu0
  %709 = vmatprep.mubr.bf16.mxu0 0
  %710 = vmatmul.mubr.bf16.gmra.mrb[0].mxu0 %v462
  %v711 = vpop.f32.mrb[0].mxu0
  %v712 = vadd.f32 0.0, %v711
  %v713 = vpop.f32.mrb[0].mxu0
  %v714 = vpop.f32.mrb[0].mxu0
  %v715 = vadd.f32 0.0, %v714
  %v716 = vpop.f32.mrb[0].mxu0
  %717 = vmatprep.mubr.bf16.mxu0 0
  %718 = vmatmul.mubr.bf16.gmra.mrb[0].mxu0 %v465
  %v719 = vpop.f32.mrb[0].mxu0
  %v720 = vadd.f32 0.0, %v719
  %v721 = vpop.f32.mrb[0].mxu0
  %v722 = vpop.f32.mrb[0].mxu0
  %v723 = vadd.f32 0.0, %v722
  %v724 = vpop.f32.mrb[0].mxu0
  %725 = vmatprep.mubr.bf16.mxu0 0
  %726 = vmatmul.mubr.bf16.gmra.mrb[0].mxu0 %v468
  %v727 = vpop.f32.mrb[0].mxu0
  %v728 = vadd.f32 0.0, %v727
  %v729 = vpop.f32.mrb[0].mxu0
  %v730 = vpop.f32.mrb[0].mxu0
  %v731 = vadd.f32 0.0, %v730
  %v732 = vpop.f32.mrb[0].mxu0
  %733 = vmatprep.mubr.bf16.mxu0 0
  %734 = vmatmul.mubr.bf16.gmra.mrb[0].mxu0 %v471
  %v735 = vpop.f32.mrb[0].mxu0
  %v736 = vadd.f32 0.0, %v735
  %v737 = vpop.f32.mrb[0].mxu0
  %v738 = vpop.f32.mrb[0].mxu0
  %v739 = vadd.f32 0.0, %v738
  %v740 = vpop.f32.mrb[0].mxu0
  %741 = vmatprep.mubr.bf16.mxu0 0
  %742 = vmatmul.mubr.bf16.gmra.mrb[0].mxu0 %v474
  %v743 = vpop.f32.mrb[0].mxu0
  %v744 = vadd.f32 0.0, %v743
  %v745 = vpop.f32.mrb[0].mxu0
  %v746 = vpop.f32.mrb[0].mxu0
  %v747 = vadd.f32 0.0, %v746
  %v748 = vpop.f32.mrb[0].mxu0
  %749 = vmatprep.mubr.bf16.mxu0 0
  %750 = vmatmul.mubr.bf16.gmra.mrb[0].mxu0 %v477
  %v751 = vpop.f32.mrb[0].mxu0
  %v752 = vadd.f32 0.0, %v751
  %v753 = vpop.f32.mrb[0].mxu0
  %v754 = vpop.f32.mrb[0].mxu0
  %v755 = vadd.f32 0.0, %v754
  %v756 = vpop.f32.mrb[0].mxu0
  %757 = vmatprep.mubr.bf16.mxu0 0
  %758 = vmatmul.mubr.bf16.gmra.mrb[0].mxu0 %v480
  %v759 = vpop.f32.mrb[0].mxu0
  %v760 = vadd.f32 0.0, %v759
  %v761 = vpop.f32.mrb[0].mxu0
  %v762 = vpop.f32.mrb[0].mxu0
  %v763 = vadd.f32 0.0, %v762
  %v764 = vpop.f32.mrb[0].mxu0
  %765 = vmatprep.mubr.bf16.mxu0 0
  %766 = vmatmul.mubr.bf16.gmra.mrb[0].mxu0 %v483
  %v767 = vpop.f32.mrb[0].mxu0
  %v768 = vadd.f32 0.0, %v767
  %v769 = vpop.f32.mrb[0].mxu0
  %v770 = vpop.f32.mrb[0].mxu0
  %v771 = vadd.f32 0.0, %v770
  %v772 = vpop.f32.mrb[0].mxu0
  %773 = vdwg.mxu0
  %v774 = vadd.f32 %v84, %v520
  %v775 = vadd.f32 %v85, %v523
  %v776 = vadd.f32 %v86, %v528
  %v777 = vadd.f32 %v87, %v531
  %v778 = vadd.f32 %v88, %v536
  %v779 = vadd.f32 %v89, %v539
  %v780 = vadd.f32 %v90, %v544
  %v781 = vadd.f32 %v91, %v547
  %v782 = vadd.f32 %v92, %v552
  %v783 = vadd.f32 %v93, %v555
  %v784 = vadd.f32 %v94, %v560
  %v785 = vadd.f32 %v95, %v563
  %v786 = vadd.f32 %v96, %v568
  %v787 = vadd.f32 %v97, %v571
  %v788 = vadd.f32 %v98, %v576
  %v789 = vadd.f32 %v99, %v579
  %v790 = vadd.f32 %v100, %v584
  %v791 = vadd.f32 %v101, %v587
  %v792 = vadd.f32 %v102, %v592
  %v793 = vadd.f32 %v103, %v595
  %v794 = vadd.f32 %v104, %v600
  %v795 = vadd.f32 %v105, %v603
  %v796 = vadd.f32 %v106, %v608
  %v797 = vadd.f32 %v107, %v611
  %v798 = vadd.f32 %v108, %v616
  %v799 = vadd.f32 %v109, %v619
  %v800 = vadd.f32 %v110, %v624
  %v801 = vadd.f32 %v111, %v627
  %v802 = vadd.f32 %v112, %v632
  %v803 = vadd.f32 %v113, %v635
  %v804 = vadd.f32 %v114, %v640
  %v805 = vadd.f32 %v115, %v643
  %v806 = vadd.f32 %v116, %v648
  %v807 = vadd.f32 %v117, %v651
  %v808 = vadd.f32 %v118, %v656
  %v809 = vadd.f32 %v119, %v659
  %v810 = vadd.f32 %v120, %v664
  %v811 = vadd.f32 %v121, %v667
  %v812 = vadd.f32 %v122, %v672
  %v813 = vadd.f32 %v123, %v675
  %v814 = vadd.f32 %v124, %v680
  %v815 = vadd.f32 %v125, %v683
  %v816 = vadd.f32 %v126, %v688
  %v817 = vadd.f32 %v127, %v691
  %v818 = vadd.f32 %v128, %v696
  %v819 = vadd.f32 %v129, %v699
  %v820 = vadd.f32 %v130, %v704
  %v821 = vadd.f32 %v131, %v707
  %v822 = vadd.f32 %v132, %v712
  %v823 = vadd.f32 %v133, %v715
  %v824 = vadd.f32 %v134, %v720
  %v825 = vadd.f32 %v135, %v723
  %v826 = vadd.f32 %v136, %v728
  %v827 = vadd.f32 %v137, %v731
  %v828 = vadd.f32 %v138, %v736
  %v829 = vadd.f32 %v139, %v739
  %v830 = vadd.f32 %v140, %v744
  %v831 = vadd.f32 %v141, %v747
  %v832 = vadd.f32 %v142, %v752
  %v833 = vadd.f32 %v143, %v755
  %v834 = vadd.f32 %v144, %v760
  %v835 = vadd.f32 %v145, %v763
  %v836 = vadd.f32 %v146, %v768
  %v837 = vadd.f32 %v147, %v771
  %vm838 = vcmask 523264
  %839 = vst.msk [vmem:[#allocation2] sm:$0xff] %vm838, %v774
  %840 = vst.msk [vmem:[#allocation2 + $0x8] sm:$0xff] %vm838, %v775
  %841 = vst.msk [vmem:[#allocation2 + $0x10] sm:$0xff] %vm838, %v776
  %842 = vst.msk [vmem:[#allocation2 + $0x18] sm:$0xff] %vm838, %v777
  %843 = vst.msk [vmem:[#allocation2 + $0x20] sm:$0xff] %vm838, %v778
  %844 = vst.msk [vmem:[#allocation2 + $0x28] sm:$0xff] %vm838, %v779
  %845 = vst.msk [vmem:[#allocation2 + $0x30] sm:$0xff] %vm838, %v780
  %846 = vst.msk [vmem:[#allocation2 + $0x38] sm:$0xff] %vm838, %v781
  %847 = vst.msk [vmem:[#allocation2 + $0x40] sm:$0xff] %vm838, %v782
  %848 = vst.msk [vmem:[#allocation2 + $0x48] sm:$0xff] %vm838, %v783
  %849 = vst.msk [vmem:[#allocation2 + $0x50] sm:$0xff] %vm838, %v784
  %850 = vst.msk [vmem:[#allocation2 + $0x58] sm:$0xff] %vm838, %v785
  %851 = vst.msk [vmem:[#allocation2 + $0x60] sm:$0xff] %vm838, %v786
  %852 = vst.msk [vmem:[#allocation2 + $0x68] sm:$0xff] %vm838, %v787
  %853 = vst.msk [vmem:[#allocation2 + $0x70] sm:$0xff] %vm838, %v788
  %854 = vst.msk [vmem:[#allocation2 + $0x78] sm:$0xff] %vm838, %v789
  %855 = vst.msk [vmem:[#allocation2 + $0x80] sm:$0xff] %vm838, %v790
  %856 = vst.msk [vmem:[#allocation2 + $0x88] sm:$0xff] %vm838, %v791
  %857 = vst.msk [vmem:[#allocation2 + $0x90] sm:$0xff] %vm838, %v792
  %858 = vst.msk [vmem:[#allocation2 + $0x98] sm:$0xff] %vm838, %v793
  %859 = vst.msk [vmem:[#allocation2 + $0xa0] sm:$0xff] %vm838, %v794
  %860 = vst.msk [vmem:[#allocation2 + $0xa8] sm:$0xff] %vm838, %v795
  %861 = vst.msk [vmem:[#allocation2 + $0xb0] sm:$0xff] %vm838, %v796
  %862 = vst.msk [vmem:[#allocation2 + $0xb8] sm:$0xff] %vm838, %v797
  %863 = vst.msk [vmem:[#allocation2 + $0xc0] sm:$0xff] %vm838, %v798
  %864 = vst.msk [vmem:[#allocation2 + $0xc8] sm:$0xff] %vm838, %v799
  %865 = vst.msk [vmem:[#allocation2 + $0xd0] sm:$0xff] %vm838, %v800
  %866 = vst.msk [vmem:[#allocation2 + $0xd8] sm:$0xff] %vm838, %v801
  %867 = vst.msk [vmem:[#allocation2 + $0xe0] sm:$0xff] %vm838, %v802
  %868 = vst.msk [vmem:[#allocation2 + $0xe8] sm:$0xff] %vm838, %v803
  %869 = vst.msk [vmem:[#allocation2 + $0xf0] sm:$0xff] %vm838, %v804
  %870 = vst.msk [vmem:[#allocation2 + $0xf8] sm:$0xff] %vm838, %v805
  %871 = vst.msk [vmem:[#allocation2 + $0x100] sm:$0xff] %vm838, %v806
  %872 = vst.msk [vmem:[#allocation2 + $0x108] sm:$0xff] %vm838, %v807
  %873 = vst.msk [vmem:[#allocation2 + $0x110] sm:$0xff] %vm838, %v808
  %874 = vst.msk [vmem:[#allocation2 + $0x118] sm:$0xff] %vm838, %v809
  %875 = vst.msk [vmem:[#allocation2 + $0x120] sm:$0xff] %vm838, %v810
  %876 = vst.msk [vmem:[#allocation2 + $0x128] sm:$0xff] %vm838, %v811
  %877 = vst.msk [vmem:[#allocation2 + $0x130] sm:$0xff] %vm838, %v812
  %878 = vst.msk [vmem:[#allocation2 + $0x138] sm:$0xff] %vm838, %v813
  %879 = vst.msk [vmem:[#allocation2 + $0x140] sm:$0xff] %vm838, %v814
  %880 = vst.msk [vmem:[#allocation2 + $0x148] sm:$0xff] %vm838, %v815
  %881 = vst.msk [vmem:[#allocation2 + $0x150] sm:$0xff] %vm838, %v816
  %882 = vst.msk [vmem:[#allocation2 + $0x158] sm:$0xff] %vm838, %v817
  %883 = vst.msk [vmem:[#allocation2 + $0x160] sm:$0xff] %vm838, %v818
  %884 = vst.msk [vmem:[#allocation2 + $0x168] sm:$0xff] %vm838, %v819
  %885 = vst.msk [vmem:[#allocation2 + $0x170] sm:$0xff] %vm838, %v820
  %886 = vst.msk [vmem:[#allocation2 + $0x178] sm:$0xff] %vm838, %v821
  %887 = vst.msk [vmem:[#allocation2 + $0x180] sm:$0xff] %vm838, %v822
  %888 = vst.msk [vmem:[#allocation2 + $0x188] sm:$0xff] %vm838, %v823
  %889 = vst.msk [vmem:[#allocation2 + $0x190] sm:$0xff] %vm838, %v824
  %890 = vst.msk [vmem:[#allocation2 + $0x198] sm:$0xff] %vm838, %v825
  %891 = vst.msk [vmem:[#allocation2 + $0x1a0] sm:$0xff] %vm838, %v826
  %892 = vst.msk [vmem:[#allocation2 + $0x1a8] sm:$0xff] %vm838, %v827
  %893 = vst.msk [vmem:[#allocation2 + $0x1b0] sm:$0xff] %vm838, %v828
  %894 = vst.msk [vmem:[#allocation2 + $0x1b8] sm:$0xff] %vm838, %v829
  %895 = vst.msk [vmem:[#allocation2 + $0x1c0] sm:$0xff] %vm838, %v830
  %896 = vst.msk [vmem:[#allocation2 + $0x1c8] sm:$0xff] %vm838, %v831
  %897 = vst.msk [vmem:[#allocation2 + $0x1d0] sm:$0xff] %vm838, %v832
  %898 = vst.msk [vmem:[#allocation2 + $0x1d8] sm:$0xff] %vm838, %v833
  %899 = vst.msk [vmem:[#allocation2 + $0x1e0] sm:$0xff] %vm838, %v834
  %900 = vst.msk [vmem:[#allocation2 + $0x1e8] sm:$0xff] %vm838, %v835
  %901 = vst.msk [vmem:[#allocation2 + $0x1f0] sm:$0xff] %vm838, %v836
  %902 = vst.msk [vmem:[#allocation2 + $0x1f8] sm:$0xff] %vm838, %v837
  // Predicated region
  $region18: #{tpu_custom_call.1} parent=0 // pred_check
    %p903 = pneg %p15
  $region19: #{tpu_custom_call.1} parent=0 // pred_check_branch
    %905 = sbr.rel (%p903) target = $region21
  $region20: #{tpu_custom_call.1} parent=0 // pred_region
    %v906 = vld [vmem:[#allocation2] sm:$0xff]
    %v907 = vld [vmem:[#allocation2 + $0x8] sm:$0xff]
    %v908 = vld [vmem:[#allocation2 + $0x10] sm:$0xff]
    %v909 = vld [vmem:[#allocation2 + $0x18] sm:$0xff]
    %v910 = vld [vmem:[#allocation2 + $0x20] sm:$0xff]
    %v911 = vld [vmem:[#allocation2 + $0x28] sm:$0xff]
    %v912 = vld [vmem:[#allocation2 + $0x30] sm:$0xff]
    %v913 = vld [vmem:[#allocation2 + $0x38] sm:$0xff]
    %v914 = vld [vmem:[#allocation2 + $0x40] sm:$0xff]
    %v915 = vld [vmem:[#allocation2 + $0x48] sm:$0xff]
    %v916 = vld [vmem:[#allocation2 + $0x50] sm:$0xff]
    %v917 = vld [vmem:[#allocation2 + $0x58] sm:$0xff]
    %v918 = vld [vmem:[#allocation2 + $0x60] sm:$0xff]
    %v919 = vld [vmem:[#allocation2 + $0x68] sm:$0xff]
    %v920 = vld [vmem:[#allocation2 + $0x70] sm:$0xff]
    %v921 = vld [vmem:[#allocation2 + $0x78] sm:$0xff]
    %v922 = vld [vmem:[#allocation2 + $0x80] sm:$0xff]
    %v923 = vld [vmem:[#allocation2 + $0x88] sm:$0xff]
    %v924 = vld [vmem:[#allocation2 + $0x90] sm:$0xff]
    %v925 = vld [vmem:[#allocation2 + $0x98] sm:$0xff]
    %v926 = vld [vmem:[#allocation2 + $0xa0] sm:$0xff]
    %v927 = vld [vmem:[#allocation2 + $0xa8] sm:$0xff]
    %v928 = vld [vmem:[#allocation2 + $0xb0] sm:$0xff]
    %v929 = vld [vmem:[#allocation2 + $0xb8] sm:$0xff]
    %v930 = vld [vmem:[#allocation2 + $0xc0] sm:$0xff]
    %v931 = vld [vmem:[#allocation2 + $0xc8] sm:$0xff]
    %v932 = vld [vmem:[#allocation2 + $0xd0] sm:$0xff]
    %v933 = vld [vmem:[#allocation2 + $0xd8] sm:$0xff]
    %v934 = vld [vmem:[#allocation2 + $0xe0] sm:$0xff]
    %v935 = vld [vmem:[#allocation2 + $0xe8] sm:$0xff]
    %v936 = vld [vmem:[#allocation2 + $0xf0] sm:$0xff]
    %v937 = vld [vmem:[#allocation2 + $0xf8] sm:$0xff]
    %v938 = vld [vmem:[#allocation2 + $0x100] sm:$0xff]
    %v939 = vld [vmem:[#allocation2 + $0x108] sm:$0xff]
    %v940 = vld [vmem:[#allocation2 + $0x110] sm:$0xff]
    %v941 = vld [vmem:[#allocation2 + $0x118] sm:$0xff]
    %v942 = vld [vmem:[#allocation2 + $0x120] sm:$0xff]
    %v943 = vld [vmem:[#allocation2 + $0x128] sm:$0xff]
    %v944 = vld [vmem:[#allocation2 + $0x130] sm:$0xff]
    %v945 = vld [vmem:[#allocation2 + $0x138] sm:$0xff]
    %v946 = vld [vmem:[#allocation2 + $0x140] sm:$0xff]
    %v947 = vld [vmem:[#allocation2 + $0x148] sm:$0xff]
    %v948 = vld [vmem:[#allocation2 + $0x150] sm:$0xff]
    %v949 = vld [vmem:[#allocation2 + $0x158] sm:$0xff]
    %v950 = vld [vmem:[#allocation2 + $0x160] sm:$0xff]
    %v951 = vld [vmem:[#allocation2 + $0x168] sm:$0xff]
    %v952 = vld [vmem:[#allocation2 + $0x170] sm:$0xff]
    %v953 = vld [vmem:[#allocation2 + $0x178] sm:$0xff]
    %v954 = vld [vmem:[#allocation2 + $0x180] sm:$0xff]
    %v955 = vld [vmem:[#allocation2 + $0x188] sm:$0xff]
    %v956 = vld [vmem:[#allocation2 + $0x190] sm:$0xff]
    %v957 = vld [vmem:[#allocation2 + $0x198] sm:$0xff]
    %v958 = vld [vmem:[#allocation2 + $0x1a0] sm:$0xff]
    %v959 = vld [vmem:[#allocation2 + $0x1a8] sm:$0xff]
    %v960 = vld [vmem:[#allocation2 + $0x1b0] sm:$0xff]
    %v961 = vld [vmem:[#allocation2 + $0x1b8] sm:$0xff]
    %v962 = vld [vmem:[#allocation2 + $0x1c0] sm:$0xff]
    %v963 = vld [vmem:[#allocation2 + $0x1c8] sm:$0xff]
    %v964 = vld [vmem:[#allocation2 + $0x1d0] sm:$0xff]
    %v965 = vld [vmem:[#allocation2 + $0x1d8] sm:$0xff]
    %v966 = vld [vmem:[#allocation2 + $0x1e0] sm:$0xff]
    %v967 = vld [vmem:[#allocation2 + $0x1e8] sm:$0xff]
    %v968 = vld [vmem:[#allocation2 + $0x1f0] sm:$0xff]
    %v969 = vld [vmem:[#allocation2 + $0x1f8] sm:$0xff]
    %v970 = vld [vmem:[%s2] sm:$0x1]
    %v972 = vlaneseq
    %v973 = vshrl.u32 %v972, 7
    %v974 = vsub.s32 0, %v973
    %v975 = vrot.slane %v970, %v974
    %v977 = vadd.f32 %v906, %v975
    %v978 = vadd.f32 %v907, %v975
    %v979 = vadd.f32 %v908, %v975
    %v980 = vadd.f32 %v909, %v975
    %v981 = vadd.f32 %v910, %v975
    %v982 = vadd.f32 %v911, %v975
    %v983 = vadd.f32 %v912, %v975
    %v984 = vadd.f32 %v913, %v975
    %v985 = vadd.f32 %v914, %v975
    %v986 = vadd.f32 %v915, %v975
    %v987 = vadd.f32 %v916, %v975
    %v988 = vadd.f32 %v917, %v975
    %v989 = vadd.f32 %v918, %v975
    %v990 = vadd.f32 %v919, %v975
    %v991 = vadd.f32 %v920, %v975
    %v992 = vadd.f32 %v921, %v975
    %v993 = vadd.f32 %v922, %v975
    %v994 = vadd.f32 %v923, %v975
    %v995 = vadd.f32 %v924, %v975
    %v996 = vadd.f32 %v925, %v975
    %v997 = vadd.f32 %v926, %v975
    %v998 = vadd.f32 %v927, %v975
    %v999 = vadd.f32 %v928, %v975
    %v1000 = vadd.f32 %v929, %v975
    %v1001 = vadd.f32 %v930, %v975
    %v1002 = vadd.f32 %v931, %v975
    %v1003 = vadd.f32 %v932, %v975
    %v1004 = vadd.f32 %v933, %v975
    %v1005 = vadd.f32 %v934, %v975
    %v1006 = vadd.f32 %v935, %v975
    %v1007 = vadd.f32 %v936, %v975
    %v1008 = vadd.f32 %v937, %v975
    %v1009 = vadd.f32 %v938, %v975
    %v1010 = vadd.f32 %v939, %v975
    %v1011 = vadd.f32 %v940, %v975
    %v1012 = vadd.f32 %v941, %v975
    %v1013 = vadd.f32 %v942, %v975
    %v1014 = vadd.f32 %v943, %v975
    %v1015 = vadd.f32 %v944, %v975
    %v1016 = vadd.f32 %v945, %v975
    %v1017 = vadd.f32 %v946, %v975
    %v1018 = vadd.f32 %v947, %v975
    %v1019 = vadd.f32 %v948, %v975
    %v1020 = vadd.f32 %v949, %v975
    %v1021 = vadd.f32 %v950, %v975
    %v1022 = vadd.f32 %v951, %v975
    %v1023 = vadd.f32 %v952, %v975
    %v1024 = vadd.f32 %v953, %v975
    %v1025 = vadd.f32 %v954, %v975
    %v1026 = vadd.f32 %v955, %v975
    %v1027 = vadd.f32 %v956, %v975
    %v1028 = vadd.f32 %v957, %v975
    %v1029 = vadd.f32 %v958, %v975
    %v1030 = vadd.f32 %v959, %v975
    %v1031 = vadd.f32 %v960, %v975
    %v1032 = vadd.f32 %v961, %v975
    %v1033 = vadd.f32 %v962, %v975
    %v1034 = vadd.f32 %v963, %v975
    %v1035 = vadd.f32 %v964, %v975
    %v1036 = vadd.f32 %v965, %v975
    %v1037 = vadd.f32 %v966, %v975
    %v1038 = vadd.f32 %v967, %v975
    %v1039 = vadd.f32 %v968, %v975
    %v1040 = vadd.f32 %v969, %v975
    %vm1041 = vcmp.ge.f32.partialorder %v977, 0.0
    %vm1042 = vcmp.ge.f32.partialorder %v978, 0.0
    %vm1043 = vcmp.ge.f32.partialorder %v979, 0.0
    %vm1044 = vcmp.ge.f32.partialorder %v980, 0.0
    %vm1045 = vcmp.ge.f32.partialorder %v981, 0.0
    %vm1046 = vcmp.ge.f32.partialorder %v982, 0.0
    %vm1047 = vcmp.ge.f32.partialorder %v983, 0.0
    %vm1048 = vcmp.ge.f32.partialorder %v984, 0.0
    %vm1049 = vcmp.ge.f32.partialorder %v985, 0.0
    %vm1050 = vcmp.ge.f32.partialorder %v986, 0.0
    %vm1051 = vcmp.ge.f32.partialorder %v987, 0.0
    %vm1052 = vcmp.ge.f32.partialorder %v988, 0.0
    %vm1053 = vcmp.ge.f32.partialorder %v989, 0.0
    %vm1054 = vcmp.ge.f32.partialorder %v990, 0.0
    %vm1055 = vcmp.ge.f32.partialorder %v991, 0.0
    %vm1056 = vcmp.ge.f32.partialorder %v992, 0.0
    %vm1057 = vcmp.ge.f32.partialorder %v993, 0.0
    %vm1058 = vcmp.ge.f32.partialorder %v994, 0.0
    %vm1059 = vcmp.ge.f32.partialorder %v995, 0.0
    %vm1060 = vcmp.ge.f32.partialorder %v996, 0.0
    %vm1061 = vcmp.ge.f32.partialorder %v997, 0.0
    %vm1062 = vcmp.ge.f32.partialorder %v998, 0.0
    %vm1063 = vcmp.ge.f32.partialorder %v999, 0.0
    %vm1064 = vcmp.ge.f32.partialorder %v1000, 0.0
    %vm1065 = vcmp.ge.f32.partialorder %v1001, 0.0
    %vm1066 = vcmp.ge.f32.partialorder %v1002, 0.0
    %vm1067 = vcmp.ge.f32.partialorder %v1003, 0.0
    %vm1068 = vcmp.ge.f32.partialorder %v1004, 0.0
    %vm1069 = vcmp.ge.f32.partialorder %v1005, 0.0
    %vm1070 = vcmp.ge.f32.partialorder %v1006, 0.0
    %vm1071 = vcmp.ge.f32.partialorder %v1007, 0.0
    %vm1072 = vcmp.ge.f32.partialorder %v1008, 0.0
    %vm1073 = vcmp.ge.f32.partialorder %v1009, 0.0
    %vm1074 = vcmp.ge.f32.partialorder %v1010, 0.0
    %vm1075 = vcmp.ge.f32.partialorder %v1011, 0.0
    %vm1076 = vcmp.ge.f32.partialorder %v1012, 0.0
    %vm1077 = vcmp.ge.f32.partialorder %v1013, 0.0
    %vm1078 = vcmp.ge.f32.partialorder %v1014, 0.0
    %vm1079 = vcmp.ge.f32.partialorder %v1015, 0.0
    %vm1080 = vcmp.ge.f32.partialorder %v1016, 0.0
    %vm1081 = vcmp.ge.f32.partialorder %v1017, 0.0
    %vm1082 = vcmp.ge.f32.partialorder %v1018, 0.0
    %vm1083 = vcmp.ge.f32.partialorder %v1019, 0.0
    %vm1084 = vcmp.ge.f32.partialorder %v1020, 0.0
    %vm1085 = vcmp.ge.f32.partialorder %v1021, 0.0
    %vm1086 = vcmp.ge.f32.partialorder %v1022, 0.0
    %vm1087 = vcmp.ge.f32.partialorder %v1023, 0.0
    %vm1088 = vcmp.ge.f32.partialorder %v1024, 0.0
    %vm1089 = vcmp.ge.f32.partialorder %v1025, 0.0
    %vm1090 = vcmp.ge.f32.partialorder %v1026, 0.0
    %vm1091 = vcmp.ge.f32.partialorder %v1027, 0.0
    %vm1092 = vcmp.ge.f32.partialorder %v1028, 0.0
    %vm1093 = vcmp.ge.f32.partialorder %v1029, 0.0
    %vm1094 = vcmp.ge.f32.partialorder %v1030, 0.0
    %vm1095 = vcmp.ge.f32.partialorder %v1031, 0.0
    %vm1096 = vcmp.ge.f32.partialorder %v1032, 0.0
    %vm1097 = vcmp.ge.f32.partialorder %v1033, 0.0
    %vm1098 = vcmp.ge.f32.partialorder %v1034, 0.0
    %vm1099 = vcmp.ge.f32.partialorder %v1035, 0.0
    %vm1100 = vcmp.ge.f32.partialorder %v1036, 0.0
    %vm1101 = vcmp.ge.f32.partialorder %v1037, 0.0
    %vm1102 = vcmp.ge.f32.partialorder %v1038, 0.0
    %vm1103 = vcmp.ge.f32.partialorder %v1039, 0.0
    %vm1104 = vcmp.ge.f32.partialorder %v1040, 0.0
    %v1105 = vmul.f32 %v977, 0.2
    %v1106 = vmul.f32 %v978, 0.2
    %v1107 = vmul.f32 %v979, 0.2
    %v1108 = vmul.f32 %v980, 0.2
    %v1109 = vmul.f32 %v981, 0.2
    %v1110 = vmul.f32 %v982, 0.2
    %v1111 = vmul.f32 %v983, 0.2
    %v1112 = vmul.f32 %v984, 0.2
    %v1113 = vmul.f32 %v985, 0.2
    %v1114 = vmul.f32 %v986, 0.2
    %v1115 = vmul.f32 %v987, 0.2
    %v1116 = vmul.f32 %v988, 0.2
    %v1117 = vmul.f32 %v989, 0.2
    %v1118 = vmul.f32 %v990, 0.2
    %v1119 = vmul.f32 %v991, 0.2
    %v1120 = vmul.f32 %v992, 0.2
    %v1121 = vmul.f32 %v993, 0.2
    %v1122 = vmul.f32 %v994, 0.2
    %v1123 = vmul.f32 %v995, 0.2
    %v1124 = vmul.f32 %v996, 0.2
    %v1125 = vmul.f32 %v997, 0.2
    %v1126 = vmul.f32 %v998, 0.2
    %v1127 = vmul.f32 %v999, 0.2
    %v1128 = vmul.f32 %v1000, 0.2
    %v1129 = vmul.f32 %v1001, 0.2
    %v1130 = vmul.f32 %v1002, 0.2
    %v1131 = vmul.f32 %v1003, 0.2
    %v1132 = vmul.f32 %v1004, 0.2
    %v1133 = vmul.f32 %v1005, 0.2
    %v1134 = vmul.f32 %v1006, 0.2
    %v1135 = vmul.f32 %v1007, 0.2
    %v1136 = vmul.f32 %v1008, 0.2
    %v1137 = vmul.f32 %v1009, 0.2
    %v1138 = vmul.f32 %v1010, 0.2
    %v1139 = vmul.f32 %v1011, 0.2
    %v1140 = vmul.f32 %v1012, 0.2
    %v1141 = vmul.f32 %v1013, 0.2
    %v1142 = vmul.f32 %v1014, 0.2
    %v1143 = vmul.f32 %v1015, 0.2
    %v1144 = vmul.f32 %v1016, 0.2
    %v1145 = vmul.f32 %v1017, 0.2
    %v1146 = vmul.f32 %v1018, 0.2
    %v1147 = vmul.f32 %v1019, 0.2
    %v1148 = vmul.f32 %v1020, 0.2
    %v1149 = vmul.f32 %v1021, 0.2
    %v1150 = vmul.f32 %v1022, 0.2
    %v1151 = vmul.f32 %v1023, 0.2
    %v1152 = vmul.f32 %v1024, 0.2
    %v1153 = vmul.f32 %v1025, 0.2
    %v1154 = vmul.f32 %v1026, 0.2
    %v1155 = vmul.f32 %v1027, 0.2
    %v1156 = vmul.f32 %v1028, 0.2
    %v1157 = vmul.f32 %v1029, 0.2
    %v1158 = vmul.f32 %v1030, 0.2
    %v1159 = vmul.f32 %v1031, 0.2
    %v1160 = vmul.f32 %v1032, 0.2
    %v1161 = vmul.f32 %v1033, 0.2
    %v1162 = vmul.f32 %v1034, 0.2
    %v1163 = vmul.f32 %v1035, 0.2
    %v1164 = vmul.f32 %v1036, 0.2
    %v1165 = vmul.f32 %v1037, 0.2
    %v1166 = vmul.f32 %v1038, 0.2
    %v1167 = vmul.f32 %v1039, 0.2
    %v1168 = vmul.f32 %v1040, 0.2
    %v1169 = vsel %vm1041, %v977, %v1105
    %v1170 = vsel %vm1042, %v978, %v1106
    %v1171 = vsel %vm1043, %v979, %v1107
    %v1172 = vsel %vm1044, %v980, %v1108
    %v1173 = vsel %vm1045, %v981, %v1109
    %v1174 = vsel %vm1046, %v982, %v1110
    %v1175 = vsel %vm1047, %v983, %v1111
    %v1176 = vsel %vm1048, %v984, %v1112
    %v1177 = vsel %vm1049, %v985, %v1113
    %v1178 = vsel %vm1050, %v986, %v1114
    %v1179 = vsel %vm1051, %v987, %v1115
    %v1180 = vsel %vm1052, %v988, %v1116
    %v1181 = vsel %vm1053, %v989, %v1117
    %v1182 = vsel %vm1054, %v990, %v1118
    %v1183 = vsel %vm1055, %v991, %v1119
    %v1184 = vsel %vm1056, %v992, %v1120
    %v1185 = vsel %vm1057, %v993, %v1121
    %v1186 = vsel %vm1058, %v994, %v1122
    %v1187 = vsel %vm1059, %v995, %v1123
    %v1188 = vsel %vm1060, %v996, %v1124
    %v1189 = vsel %vm1061, %v997, %v1125
    %v1190 = vsel %vm1062, %v998, %v1126
    %v1191 = vsel %vm1063, %v999, %v1127
    %v1192 = vsel %vm1064, %v1000, %v1128
    %v1193 = vsel %vm1065, %v1001, %v1129
    %v1194 = vsel %vm1066, %v1002, %v1130
    %v1195 = vsel %vm1067, %v1003, %v1131
    %v1196 = vsel %vm1068, %v1004, %v1132
    %v1197 = vsel %vm1069, %v1005, %v1133
    %v1198 = vsel %vm1070, %v1006, %v1134
    %v1199 = vsel %vm1071, %v1007, %v1135
    %v1200 = vsel %vm1072, %v1008, %v1136
    %v1201 = vsel %vm1073, %v1009, %v1137
    %v1202 = vsel %vm1074, %v1010, %v1138
    %v1203 = vsel %vm1075, %v1011, %v1139
    %v1204 = vsel %vm1076, %v1012, %v1140
    %v1205 = vsel %vm1077, %v1013, %v1141
    %v1206 = vsel %vm1078, %v1014, %v1142
    %v1207 = vsel %vm1079, %v1015, %v1143
    %v1208 = vsel %vm1080, %v1016, %v1144
    %v1209 = vsel %vm1081, %v1017, %v1145
    %v1210 = vsel %vm1082, %v1018, %v1146
    %v1211 = vsel %vm1083, %v1019, %v1147
    %v1212 = vsel %vm1084, %v1020, %v1148
    %v1213 = vsel %vm1085, %v1021, %v1149
    %v1214 = vsel %vm1086, %v1022, %v1150
    %v1215 = vsel %vm1087, %v1023, %v1151
    %v1216 = vsel %vm1088, %v1024, %v1152
    %v1217 = vsel %vm1089, %v1025, %v1153
    %v1218 = vsel %vm1090, %v1026, %v1154
    %v1219 = vsel %vm1091, %v1027, %v1155
    %v1220 = vsel %vm1092, %v1028, %v1156
    %v1221 = vsel %vm1093, %v1029, %v1157
    %v1222 = vsel %vm1094, %v1030, %v1158
    %v1223 = vsel %vm1095, %v1031, %v1159
    %v1224 = vsel %vm1096, %v1032, %v1160
    %v1225 = vsel %vm1097, %v1033, %v1161
    %v1226 = vsel %vm1098, %v1034, %v1162
    %v1227 = vsel %vm1099, %v1035, %v1163
    %v1228 = vsel %vm1100, %v1036, %v1164
    %v1229 = vsel %vm1101, %v1037, %v1165
    %v1230 = vsel %vm1102, %v1038, %v1166
    %v1231 = vsel %vm1103, %v1039, %v1167
    %v1232 = vsel %vm1104, %v1040, %v1168
    %v1233 = vpack.c.bf16 %v1170, %v1169
    %v1234 = vpack.c.bf16 %v1172, %v1171
    %v1235 = vpack.c.bf16 %v1174, %v1173
    %v1236 = vpack.c.bf16 %v1176, %v1175
    %v1237 = vpack.c.bf16 %v1178, %v1177
    %v1238 = vpack.c.bf16 %v1180, %v1179
    %v1239 = vpack.c.bf16 %v1182, %v1181
    %v1240 = vpack.c.bf16 %v1184, %v1183
    %v1241 = vpack.c.bf16 %v1186, %v1185
    %v1242 = vpack.c.bf16 %v1188, %v1187
    %v1243 = vpack.c.bf16 %v1190, %v1189
    %v1244 = vpack.c.bf16 %v1192, %v1191
    %v1245 = vpack.c.bf16 %v1194, %v1193
    %v1246 = vpack.c.bf16 %v1196, %v1195
    %v1247 = vpack.c.bf16 %v1198, %v1197
    %v1248 = vpack.c.bf16 %v1200, %v1199
    %v1249 = vpack.c.bf16 %v1202, %v1201
    %v1250 = vpack.c.bf16 %v1204, %v1203
    %v1251 = vpack.c.bf16 %v1206, %v1205
    %v1252 = vpack.c.bf16 %v1208, %v1207
    %v1253 = vpack.c.bf16 %v1210, %v1209
    %v1254 = vpack.c.bf16 %v1212, %v1211
    %v1255 = vpack.c.bf16 %v1214, %v1213
    %v1256 = vpack.c.bf16 %v1216, %v1215
    %v1257 = vpack.c.bf16 %v1218, %v1217
    %v1258 = vpack.c.bf16 %v1220, %v1219
    %v1259 = vpack.c.bf16 %v1222, %v1221
    %v1260 = vpack.c.bf16 %v1224, %v1223
    %v1261 = vpack.c.bf16 %v1226, %v1225
    %v1262 = vpack.c.bf16 %v1228, %v1227
    %v1263 = vpack.c.bf16 %v1230, %v1229
    %v1264 = vpack.c.bf16 %v1232, %v1231
    %v1297 = vunpack.c.l.b16 %v1233
    %v1298 = vunpack.c.h.b16 %v1233
    %v1299 = vunpack.c.l.b16 %v1234
    %v1300 = vunpack.c.h.b16 %v1234
    %v1301 = vunpack.c.l.b16 %v1235
    %v1302 = vunpack.c.h.b16 %v1235
    %v1303 = vunpack.c.l.b16 %v1236
    %v1304 = vunpack.c.h.b16 %v1236
    %v1305 = vunpack.c.l.b16 %v1237
    %v1306 = vunpack.c.h.b16 %v1237
    %v1307 = vunpack.c.l.b16 %v1238
    %v1308 = vunpack.c.h.b16 %v1238
    %v1309 = vunpack.c.l.b16 %v1239
    %v1310 = vunpack.c.h.b16 %v1239
    %v1311 = vunpack.c.l.b16 %v1240
    %v1312 = vunpack.c.h.b16 %v1240
    %v1313 = vunpack.c.l.b16 %v1241
    %v1314 = vunpack.c.h.b16 %v1241
    %v1315 = vunpack.c.l.b16 %v1242
    %v1316 = vunpack.c.h.b16 %v1242
    %v1317 = vunpack.c.l.b16 %v1243
    %v1318 = vunpack.c.h.b16 %v1243
    %v1319 = vunpack.c.l.b16 %v1244
    %v1320 = vunpack.c.h.b16 %v1244
    %v1321 = vunpack.c.l.b16 %v1245
    %v1322 = vunpack.c.h.b16 %v1245
    %v1323 = vunpack.c.l.b16 %v1246
    %v1324 = vunpack.c.h.b16 %v1246
    %v1325 = vunpack.c.l.b16 %v1247
    %v1326 = vunpack.c.h.b16 %v1247
    %v1327 = vunpack.c.l.b16 %v1248
    %v1328 = vunpack.c.h.b16 %v1248
    %v1329 = vunpack.c.l.b16 %v1249
    %v1330 = vunpack.c.h.b16 %v1249
    %v1331 = vunpack.c.l.b16 %v1250
    %v1332 = vunpack.c.h.b16 %v1250
    %v1333 = vunpack.c.l.b16 %v1251
    %v1334 = vunpack.c.h.b16 %v1251
    %v1335 = vunpack.c.l.b16 %v1252
    %v1336 = vunpack.c.h.b16 %v1252
    %v1337 = vunpack.c.l.b16 %v1253
    %v1338 = vunpack.c.h.b16 %v1253
    %v1339 = vunpack.c.l.b16 %v1254
    %v1340 = vunpack.c.h.b16 %v1254
    %v1341 = vunpack.c.l.b16 %v1255
    %v1342 = vunpack.c.h.b16 %v1255
    %v1343 = vunpack.c.l.b16 %v1256
    %v1344 = vunpack.c.h.b16 %v1256
    %v1345 = vunpack.c.l.b16 %v1257
    %v1346 = vunpack.c.h.b16 %v1257
    %v1347 = vunpack.c.l.b16 %v1258
    %v1348 = vunpack.c.h.b16 %v1258
    %v1349 = vunpack.c.l.b16 %v1259
    %v1350 = vunpack.c.h.b16 %v1259
    %v1351 = vunpack.c.l.b16 %v1260
    %v1352 = vunpack.c.h.b16 %v1260
    %v1353 = vunpack.c.l.b16 %v1261
    %v1354 = vunpack.c.h.b16 %v1261
    %v1355 = vunpack.c.l.b16 %v1262
    %v1356 = vunpack.c.h.b16 %v1262
    %v1357 = vunpack.c.l.b16 %v1263
    %v1358 = vunpack.c.h.b16 %v1263
    %v1359 = vunpack.c.l.b16 %v1264
    %v1360 = vunpack.c.h.b16 %v1264
    %v1361 = vpack.c.b16 %v1297, %v1297
    %v1362 = vpack.c.b16 %v1298, %v1298
    %v1363 = vpack.c.b16 %v1299, %v1299
    %v1364 = vpack.c.b16 %v1300, %v1300
    %v1365 = vpack.c.b16 %v1301, %v1301
    %v1366 = vpack.c.b16 %v1302, %v1302
    %v1367 = vpack.c.b16 %v1303, %v1303
    %v1368 = vpack.c.b16 %v1304, %v1304
    %v1369 = vpack.c.b16 %v1305, %v1305
    %v1370 = vpack.c.b16 %v1306, %v1306
    %v1371 = vpack.c.b16 %v1307, %v1307
    %v1372 = vpack.c.b16 %v1308, %v1308
    %v1373 = vpack.c.b16 %v1309, %v1309
    %v1374 = vpack.c.b16 %v1310, %v1310
    %v1375 = vpack.c.b16 %v1311, %v1311
    %v1376 = vpack.c.b16 %v1312, %v1312
    %v1377 = vpack.c.b16 %v1313, %v1313
    %v1378 = vpack.c.b16 %v1314, %v1314
    %v1379 = vpack.c.b16 %v1315, %v1315
    %v1380 = vpack.c.b16 %v1316, %v1316
    %v1381 = vpack.c.b16 %v1317, %v1317
    %v1382 = vpack.c.b16 %v1318, %v1318
    %v1383 = vpack.c.b16 %v1319, %v1319
    %v1384 = vpack.c.b16 %v1320, %v1320
    %v1385 = vpack.c.b16 %v1321, %v1321
    %v1386 = vpack.c.b16 %v1322, %v1322
    %v1387 = vpack.c.b16 %v1323, %v1323
    %v1388 = vpack.c.b16 %v1324, %v1324
    %v1389 = vpack.c.b16 %v1325, %v1325
    %v1390 = vpack.c.b16 %v1326, %v1326
    %v1391 = vpack.c.b16 %v1327, %v1327
    %v1392 = vpack.c.b16 %v1328, %v1328
    %v1393 = vpack.c.b16 %v1329, %v1329
    %v1394 = vpack.c.b16 %v1330, %v1330
    %v1395 = vpack.c.b16 %v1331, %v1331
    %v1396 = vpack.c.b16 %v1332, %v1332
    %v1397 = vpack.c.b16 %v1333, %v1333
    %v1398 = vpack.c.b16 %v1334, %v1334
    %v1399 = vpack.c.b16 %v1335, %v1335
    %v1400 = vpack.c.b16 %v1336, %v1336
    %v1401 = vpack.c.b16 %v1337, %v1337
    %v1402 = vpack.c.b16 %v1338, %v1338
    %v1403 = vpack.c.b16 %v1339, %v1339
    %v1404 = vpack.c.b16 %v1340, %v1340
    %v1405 = vpack.c.b16 %v1341, %v1341
    %v1406 = vpack.c.b16 %v1342, %v1342
    %v1407 = vpack.c.b16 %v1343, %v1343
    %v1408 = vpack.c.b16 %v1344, %v1344
    %v1409 = vpack.c.b16 %v1345, %v1345
    %v1410 = vpack.c.b16 %v1346, %v1346
    %v1411 = vpack.c.b16 %v1347, %v1347
    %v1412 = vpack.c.b16 %v1348, %v1348
    %v1413 = vpack.c.b16 %v1349, %v1349
    %v1414 = vpack.c.b16 %v1350, %v1350
    %v1415 = vpack.c.b16 %v1351, %v1351
    %v1416 = vpack.c.b16 %v1352, %v1352
    %v1417 = vpack.c.b16 %v1353, %v1353
    %v1418 = vpack.c.b16 %v1354, %v1354
    %v1419 = vpack.c.b16 %v1355, %v1355
    %v1420 = vpack.c.b16 %v1356, %v1356
    %v1421 = vpack.c.b16 %v1357, %v1357
    %v1422 = vpack.c.b16 %v1358, %v1358
    %v1423 = vpack.c.b16 %v1359, %v1359
    %v1424 = vpack.c.b16 %v1360, %v1360
    %vm1489 = vcmask 519168
    %1490 = vst.msk [vmem:[%s3] sm:$0xf] %vm1489, %v1361
    %1491 = vst.msk [vmem:[%s3 + $0x4] sm:$0xf] %vm1489, %v1362
    %1492 = vst.msk [vmem:[%s3 + $0x8] sm:$0xf] %vm1489, %v1363
    %1493 = vst.msk [vmem:[%s3 + $0xc] sm:$0xf] %vm1489, %v1364
    %1494 = vst.msk [vmem:[%s3 + $0x10] sm:$0xf] %vm1489, %v1365
    %1495 = vst.msk [vmem:[%s3 + $0x14] sm:$0xf] %vm1489, %v1366
    %1496 = vst.msk [vmem:[%s3 + $0x18] sm:$0xf] %vm1489, %v1367
    %1497 = vst.msk [vmem:[%s3 + $0x1c] sm:$0xf] %vm1489, %v1368
    %1498 = vst.msk [vmem:[%s3 + $0x20] sm:$0xf] %vm1489, %v1369
    %1499 = vst.msk [vmem:[%s3 + $0x24] sm:$0xf] %vm1489, %v1370
    %1500 = vst.msk [vmem:[%s3 + $0x28] sm:$0xf] %vm1489, %v1371
    %1501 = vst.msk [vmem:[%s3 + $0x2c] sm:$0xf] %vm1489, %v1372
    %1502 = vst.msk [vmem:[%s3 + $0x30] sm:$0xf] %vm1489, %v1373
    %1503 = vst.msk [vmem:[%s3 + $0x34] sm:$0xf] %vm1489, %v1374
    %1504 = vst.msk [vmem:[%s3 + $0x38] sm:$0xf] %vm1489, %v1375
    %1505 = vst.msk [vmem:[%s3 + $0x3c] sm:$0xf] %vm1489, %v1376
    %1506 = vst.msk [vmem:[%s3 + $0x40] sm:$0xf] %vm1489, %v1377
    %1507 = vst.msk [vmem:[%s3 + $0x44] sm:$0xf] %vm1489, %v1378
    %1508 = vst.msk [vmem:[%s3 + $0x48] sm:$0xf] %vm1489, %v1379
    %1509 = vst.msk [vmem:[%s3 + $0x4c] sm:$0xf] %vm1489, %v1380
    %1510 = vst.msk [vmem:[%s3 + $0x50] sm:$0xf] %vm1489, %v1381
    %1511 = vst.msk [vmem:[%s3 + $0x54] sm:$0xf] %vm1489, %v1382
    %1512 = vst.msk [vmem:[%s3 + $0x58] sm:$0xf] %vm1489, %v1383
    %1513 = vst.msk [vmem:[%s3 + $0x5c] sm:$0xf] %vm1489, %v1384
    %1514 = vst.msk [vmem:[%s3 + $0x60] sm:$0xf] %vm1489, %v1385
    %1515 = vst.msk [vmem:[%s3 + $0x64] sm:$0xf] %vm1489, %v1386
    %1516 = vst.msk [vmem:[%s3 + $0x68] sm:$0xf] %vm1489, %v1387
    %1517 = vst.msk [vmem:[%s3 + $0x6c] sm:$0xf] %vm1489, %v1388
    %1518 = vst.msk [vmem:[%s3 + $0x70] sm:$0xf] %vm1489, %v1389
    %1519 = vst.msk [vmem:[%s3 + $0x74] sm:$0xf] %vm1489, %v1390
    %1520 = vst.msk [vmem:[%s3 + $0x78] sm:$0xf] %vm1489, %v1391
    %1521 = vst.msk [vmem:[%s3 + $0x7c] sm:$0xf] %vm1489, %v1392
    %1522 = vst.msk [vmem:[%s3 + $0x80] sm:$0xf] %vm1489, %v1393
    %1523 = vst.msk [vmem:[%s3 + $0x84] sm:$0xf] %vm1489, %v1394
    %1524 = vst.msk [vmem:[%s3 + $0x88] sm:$0xf] %vm1489, %v1395
    %1525 = vst.msk [vmem:[%s3 + $0x8c] sm:$0xf] %vm1489, %v1396
    %1526 = vst.msk [vmem:[%s3 + $0x90] sm:$0xf] %vm1489, %v1397
    %1527 = vst.msk [vmem:[%s3 + $0x94] sm:$0xf] %vm1489, %v1398
    %1528 = vst.msk [vmem:[%s3 + $0x98] sm:$0xf] %vm1489, %v1399
    %1529 = vst.msk [vmem:[%s3 + $0x9c] sm:$0xf] %vm1489, %v1400
    %1530 = vst.msk [vmem:[%s3 + $0xa0] sm:$0xf] %vm1489, %v1401
    %1531 = vst.msk [vmem:[%s3 + $0xa4] sm:$0xf] %vm1489, %v1402
    %1532 = vst.msk [vmem:[%s3 + $0xa8] sm:$0xf] %vm1489, %v1403
    %1533 = vst.msk [vmem:[%s3 + $0xac] sm:$0xf] %vm1489, %v1404
    %1534 = vst.msk [vmem:[%s3 + $0xb0] sm:$0xf] %vm1489, %v1405
    %1535 = vst.msk [vmem:[%s3 + $0xb4] sm:$0xf] %vm1489, %v1406
    %1536 = vst.msk [vmem:[%s3 + $0xb8] sm:$0xf] %vm1489, %v1407
    %1537 = vst.msk [vmem:[%s3 + $0xbc] sm:$0xf] %vm1489, %v1408
    %1538 = vst.msk [vmem:[%s3 + $0xc0] sm:$0xf] %vm1489, %v1409
    %1539 = vst.msk [vmem:[%s3 + $0xc4] sm:$0xf] %vm1489, %v1410
    %1540 = vst.msk [vmem:[%s3 + $0xc8] sm:$0xf] %vm1489, %v1411
    %1541 = vst.msk [vmem:[%s3 + $0xcc] sm:$0xf] %vm1489, %v1412
    %1542 = vst.msk [vmem:[%s3 + $0xd0] sm:$0xf] %vm1489, %v1413
    %1543 = vst.msk [vmem:[%s3 + $0xd4] sm:$0xf] %vm1489, %v1414
    %1544 = vst.msk [vmem:[%s3 + $0xd8] sm:$0xf] %vm1489, %v1415
    %1545 = vst.msk [vmem:[%s3 + $0xdc] sm:$0xf] %vm1489, %v1416
    %1546 = vst.msk [vmem:[%s3 + $0xe0] sm:$0xf] %vm1489, %v1417
    %1547 = vst.msk [vmem:[%s3 + $0xe4] sm:$0xf] %vm1489, %v1418
    %1548 = vst.msk [vmem:[%s3 + $0xe8] sm:$0xf] %vm1489, %v1419
    %1549 = vst.msk [vmem:[%s3 + $0xec] sm:$0xf] %vm1489, %v1420
    %1550 = vst.msk [vmem:[%s3 + $0xf0] sm:$0xf] %vm1489, %v1421
    %1551 = vst.msk [vmem:[%s3 + $0xf4] sm:$0xf] %vm1489, %v1422
    %1552 = vst.msk [vmem:[%s3 + $0xf8] sm:$0xf] %vm1489, %v1423
    %1553 = vst.msk [vmem:[%s3 + $0xfc] sm:$0xf] %vm1489, %v1424
  $region21: #{tpu_custom_call.1} parent=0 // pred_fallthru
    _
  // Predicated region
  $region22: #{tpu_custom_call.1} parent=0 // pred_check
    _
  $region23: #{tpu_custom_call.1} parent=0 // pred_check_branch
    %1555 = sbr.rel (0) target = $region25
  $region24: #{tpu_custom_call.1} parent=0 // pred_region
    _
  $region25: #{tpu_custom_call.1} parent=0 // pred_fallthru
    _
  // Predicated region
  $region26: #{tpu_custom_call.1} parent=0 // pred_check
    _
  $region27: #{tpu_custom_call.1} parent=0 // pred_check_branch
    %1557 = sbr.rel (0) target = $region29
  $region28: #{tpu_custom_call.1} parent=0 // pred_region
    _
  $region29: #{tpu_custom_call.1} parent=0 // pred_fallthru
    _

</llo_original>
